<compile_context>
chip_gen: v7x
topology: tpu7x:2x2x1
jax: 0.10.0
libtpu: 0.0.40
codegen_flags: <defaults>
</compile_context>

<pallas_src>
import jax
import jax.numpy as jnp
from jax.experimental import pallas as pl
from jax.experimental.pallas import tpu as pltpu

BN_EPS = 1e-5
LEAKY_SLOPE = 0.1
LANE = 128


def _round_up(x, m):
    return (x + m - 1) // m * m


def _vmem_capacity():
    try:
        info = pltpu.get_tpu_info()
        cap = getattr(info, "vmem_capacity_bytes", None)
        if cap:
            return int(cap)
    except Exception:
        pass
    return 64 << 20  # conservative default (v7x per-TC)


def _vmem_limit(requested_bytes):
    # Actual footprint + slack, clamped to 75% of this generation's VMEM.
    cap = _vmem_capacity()
    return int(min(max(int(requested_bytes) + (2 << 20), 4 << 20),
                   int(0.75 * cap)))


def _spec(block_shape, index_map, single_buffer=False):
    """BlockSpec; resident (fetched-once) operands get a single buffer."""
    if single_buffer:
        return pl.BlockSpec(block_shape, index_map,
                            pipeline_mode=pl.Buffered(1))
    return pl.BlockSpec(block_shape, index_map)


def _run_with_single_buffer_fallback(run):
    # pl.Buffered(1) on resident operands frees one weight-copy of VMEM; if
    # this JAX/Mosaic build rejects the knob, fall back to default buffering.
    try:
        return run(True)
    except Exception:
        return run(False)


# ---- pass 1: K-tiled conv3x3 matmul + per-row-tile BN partial statistics ----

def _conv3x3_stats_kernel(p_ref, w1_ref, acc_out_ref, sum_ref, ssq_ref, acc_sc):
    """p:(bm,tk) bf16, w1:(tk,Cmp) bf16 -> acc_out:(bm,Cmp) bf16,
       sum/ssq:(1,1,Cmp) f32 (computed from the f32 accumulator)."""
    k = pl.program_id(1)

    @pl.when(k == 0)
    def _():
        acc_sc[...] = jnp.zeros_like(acc_sc)

    acc_sc[...] += jnp.dot(p_ref[...], w1_ref[...],
                           preferred_element_type=jnp.float32)

    @pl.when(k == pl.num_programs(1) - 1)
    def _():
        acc = acc_sc[...]                                   # f32
        acc_out_ref[...] = acc.astype(acc_out_ref.dtype)    # bf16 store
        s = jnp.sum(acc, axis=0, keepdims=True)             # (1, Cmp)
        ss = jnp.sum(acc * acc, axis=0, keepdims=True)      # (1, Cmp)
        sum_ref[...] = s[None]                              # (1, 1, Cmp)
        ssq_ref[...] = ss[None]


# ---- pass 2: folded BN scale/shift + LeakyReLU + 1x1 conv + bias -----------

def _bn_act_conv1x1_kernel(acc_ref, scale_ref, shift_ref, w2_ref, b2_ref,
                           out_ref):
    y = acc_ref[...].astype(jnp.float32) * scale_ref[...] + shift_ref[...]
    y = jnp.where(y > 0, y, LEAKY_SLOPE * y)                # LeakyReLU(0.1)
    out = jnp.dot(y.astype(jnp.bfloat16), w2_ref[...],
                  preferred_element_type=jnp.float32)       # 1x1 conv
    out_ref[...] = (out + b2_ref[...]).astype(out_ref.dtype)


def scale_prediction_forward(x_nchw, w1_oihw, gamma, beta, w2_oihw, b2,
                             num_classes):
    """NCHW input -> (N, 3, H, W, num_classes+5), PyTorch-equivalent."""
    N, Cin, H, W = x_nchw.shape
    Cmid = w1_oihw.shape[0]
    Cout = w2_oihw.shape[0]
    assert Cout == 3 * (num_classes + 5)
    M = N * H * W

    Cmid_pad = _round_up(Cmid, LANE)
    Cout_pad = _round_up(Cout, LANE)

    # K (reduction) tiling: cap the 3x3-weight tile so pass 1 fits v7x VMEM
    # even at large Cin; padded K columns/rows are zero so extra pad is inert.
    K = 9 * Cin
    tk = min(_round_up(K, LANE), 2048)
    K_pad = _round_up(K, tk)
    num_k = K_pad // tk

    # Row-tile sizes: pass 2 is HBM-bound -> bigger tile; keep >= 2 blocks when
    # the problem allows so the parallel axis shards across v7x's two cores.
    if M >= 2048:
        block_m1, block_m2 = 512, 1024
    elif M >= 1024:
        block_m1, block_m2 = 512, 512
    else:
        block_m1, block_m2 = 256, 256

    # Shrink tiles if (conservative, double-buffered) footprints exceed VMEM.
    budget = int(0.7 * _vmem_capacity())
    while block_m1 > 256 and (2 * block_m1 * tk * 2 + 2 * tk * Cmid_pad * 2 +
                              2 * block_m1 * Cmid_pad * 2 +
                              block_m1 * Cmid_pad * 4) > budget:
        block_m1 //= 2
    while block_m2 > 256 and (2 * block_m2 * Cmid_pad * 2 +
                              2 * Cmid_pad * Cout_pad * 2 +
                              2 * block_m2 * Cout_pad * 2) > budget:
        block_m2 //= 2
    block_m1 = min(block_m1, block_m2)     # block_m1 divides block_m2

    M_pad = _round_up(M, block_m2)
    nb1 = M_pad // block_m1
    nb2 = M_pad // block_m2

    # ---- XLA glue: layout conversion + im2col (done once, outside kernel).
    # TODO(synk): replace the 9x im2col HBM expansion with an in-kernel
    # tap-stationary conv (halo'd NHWC row tiles, 9 shifted K=Cin matmuls) to
    # remove the extra HBM write+read pass, especially on bandwidth-poor v5e.
    x_nhwc = jnp.transpose(x_nchw, (0, 2, 3, 1))
    xpad = jnp.pad(x_nhwc, ((0, 0), (1, 1), (1, 1), (0, 0)))
    patches = jnp.concatenate(
        [xpad[:, dh:dh + H, dw:dw + W, :] for dh in range(3) for dw in range(3)],
        axis=-1).reshape(M, K)
    patches = jnp.pad(patches, ((0, M_pad - M), (0, K_pad - K)))
    patches = patches.astype(jnp.bfloat16)

    # 3x3 weights: OIHW -> (kh, kw, I, O) -> (9*Cin, Cmid); matches im2col.
    w1_mat = jnp.transpose(w1_oihw, (2, 3, 1, 0)).reshape(K, Cmid)
    w1_mat = jnp.pad(w1_mat, ((0, K_pad - K), (0, Cmid_pad - Cmid)))
    w1_mat = w1_mat.astype(jnp.bfloat16)

    # ---- pass 1: K-tiled conv3x3 + per-tile partial BN statistics.
    def _run_pass1(single):
        w1_single = single and (num_k == 1)
        bytes1 = (2 * block_m1 * tk * 2                       # patches (x2)
                  + (1 if w1_single else 2) * tk * Cmid_pad * 2  # w1 tile
                  + 2 * block_m1 * Cmid_pad * 2               # bf16 acc out
                  + 2 * 2 * Cmid_pad * 4                      # sum/ssq outs
                  + block_m1 * Cmid_pad * 4)                  # f32 scratch
        return pl.pallas_call(
            _conv3x3_stats_kernel,
            grid=(nb1, num_k),
            in_specs=[
                pl.BlockSpec((block_m1, tk), lambda i, k: (i, k)),
                _spec((tk, Cmid_pad), lambda i, k: (k, 0), w1_single),
            ],
            out_specs=(
                pl.BlockSpec((block_m1, Cmid_pad), lambda i, k: (i, 0)),
                pl.BlockSpec((1, 1, Cmid_pad), lambda i, k: (i, 0, 0)),
                pl.BlockSpec((1, 1, Cmid_pad), lambda i, k: (i, 0, 0)),
            ),
            out_shape=(
                jax.ShapeDtypeStruct((M_pad, Cmid_pad), jnp.bfloat16),
                jax.ShapeDtypeStruct((nb1, 1, Cmid_pad), jnp.float32),
                jax.ShapeDtypeStruct((nb1, 1, Cmid_pad), jnp.float32),
            ),
            scratch_shapes=[pltpu.VMEM((block_m1, Cmid_pad), jnp.float32)],
            compiler_params=pltpu.CompilerParams(
                dimension_semantics=("parallel", "arbitrary"),
                vmem_limit_bytes=_vmem_limit(bytes1)),
        )(patches, w1_mat)

    acc, sums, ssqs = _run_with_single_buffer_fallback(_run_pass1)

    # ---- tiny XLA glue: fold batch stats (training-mode, biased variance)
    #      into per-channel scale/shift.  Padded rows are zero -> contribute
    #      nothing to sum/sumsq; divide by the true M.
    # TODO(synk): for very large M with |mean| >> std, E[x^2]-E[x]^2 in f32 can
    # cancel; switch to per-tile centered partial sums + Chan's combine.
    total_sum = jnp.sum(sums, axis=(0, 1))                   # (Cmid_pad,)
    total_ssq = jnp.sum(ssqs, axis=(0, 1))
    mean = total_sum / M
    var = jnp.maximum(total_ssq / M - mean * mean, 0.0)      # biased variance
    inv = jax.lax.rsqrt(var + BN_EPS)
    gamma_p = jnp.pad(gamma.astype(jnp.float32), (0, Cmid_pad - Cmid))
    beta_p = jnp.pad(beta.astype(jnp.float32), (0, Cmid_pad - Cmid))
    scale = (gamma_p * inv).reshape(1, Cmid_pad)
    shift = (beta_p - mean * gamma_p * inv).reshape(1, Cmid_pad)

    # 1x1 conv weights / bias, padded to lane-dense shapes.
    w2_mat = jnp.transpose(w2_oihw[:, :, 0, 0], (1, 0))      # (Cmid, Cout)
    w2_mat = jnp.pad(w2_mat, ((0, Cmid_pad - Cmid), (0, Cout_pad - Cout)))
    w2_mat = w2_mat.astype(jnp.bfloat16)
    b2_p = jnp.pad(b2.astype(jnp.float32), (0, Cout_pad - Cout))
    b2_p = b2_p.reshape(1, Cout_pad)

    # ---- pass 2: BN-apply + LeakyReLU + 1x1 conv, lane-dense bf16 output.
    def _run_pass2(single):
        nres = 1 if single else 2
        bytes2 = (2 * block_m2 * Cmid_pad * 2                 # bf16 acc in
                  + nres * (2 * Cmid_pad * 4                  # scale + shift
                            + Cmid_pad * Cout_pad * 2         # w2
                            + Cout_pad * 4)                   # b2
                  + 2 * block_m2 * Cout_pad * 2)              # bf16 out
        return pl.pallas_call(
            _bn_act_conv1x1_kernel,
            grid=(nb2,),
            in_specs=[
                pl.BlockSpec((block_m2, Cmid_pad), lambda i: (i, 0)),
                _spec((1, Cmid_pad), lambda i: (0, 0), single),
                _spec((1, Cmid_pad), lambda i: (0, 0), single),
                _spec((Cmid_pad, Cout_pad), lambda i: (0, 0), single),
                _spec((1, Cout_pad), lambda i: (0, 0), single),
            ],
            out_specs=pl.BlockSpec((block_m2, Cout_pad), lambda i: (i, 0)),
            out_shape=jax.ShapeDtypeStruct((M_pad, Cout_pad), jnp.bfloat16),
            compiler_params=pltpu.CompilerParams(
                dimension_semantics=("parallel",),
                vmem_limit_bytes=_vmem_limit(bytes2)),
        )(acc, scale, shift, w2_mat, b2_p)

    out_flat = _run_with_single_buffer_fallback(_run_pass2)

    # ---- PyTorch-equivalent reshape/permute (XLA; keeps kernel lane-dense).
    out = out_flat[:M, :Cout].astype(jnp.float32)
    out = out.reshape(N, H, W, 3, num_classes + 5)
    return jnp.transpose(out, (0, 3, 1, 2, 4))


def reference_forward(x_nchw, w1_oihw, gamma, beta, w2_oihw, b2, num_classes):
    """Plain-JAX f32 reference mirroring the PyTorch module (for validation)."""
    N, _, H, W = x_nchw.shape
    y = jax.lax.conv_general_dilated(
        x_nchw, w1_oihw, window_strides=(1, 1), padding=((1, 1), (1, 1)),
        dimension_numbers=("NCHW", "OIHW", "NCHW"))
    mean = jnp.mean(y, axis=(0, 2, 3), keepdims=True)
    var = jnp.mean((y - mean) ** 2, axis=(0, 2, 3), keepdims=True)
    yn = (y - mean) / jnp.sqrt(var + BN_EPS)
    yn = yn * gamma.reshape(1, -1, 1, 1) + beta.reshape(1, -1, 1, 1)
    y = jnp.where(yn > 0, yn, LEAKY_SLOPE * yn)
    out = jax.lax.conv_general_dilated(
        y, w2_oihw, window_strides=(1, 1), padding=((0, 0), (0, 0)),
        dimension_numbers=("NCHW", "OIHW", "NCHW"))
    out = out + b2.reshape(1, -1, 1, 1)
    out = out.reshape(N, 3, num_classes + 5, H, W)
    return jnp.transpose(out, (0, 1, 3, 4, 2))


if __name__ == "__main__":
    # Small, deterministic problem: batch=2, in_channels=4, 16x16, 3 classes.
    N, Cin, H, W = 2, 4, 16, 16
    num_classes = 3
    Cmid = 2 * Cin                      # 8
    Cout = 3 * (num_classes + 5)        # 24

    key = jax.random.PRNGKey(0)
    kx, kw1, kg, kb, kw2, kb2 = jax.random.split(key, 6)

    x = jax.random.normal(kx, (N, Cin, H, W), dtype=jnp.float32)
    w1 = 0.1 * jax.random.normal(kw1, (Cmid, Cin, 3, 3), dtype=jnp.float32)   # OIHW
    gamma = 1.0 + 0.1 * jax.random.normal(kg, (Cmid,), dtype=jnp.float32)
    beta = 0.1 * jax.random.normal(kb, (Cmid,), dtype=jnp.float32)
    w2 = 0.1 * jax.random.normal(kw2, (Cout, Cmid, 1, 1), dtype=jnp.float32)  # OIHW
    b2 = 0.1 * jax.random.normal(kb2, (Cout,), dtype=jnp.float32)

    out = scale_prediction_forward(x, w1, gamma, beta, w2, b2, num_classes)
    out = jax.block_until_ready(out)

    ref = reference_forward(x, w1, gamma, beta, w2, b2, num_classes)
    assert out.shape == (N, 3, H, W, num_classes + 5), out.shape
    # Tolerance reflects bf16 MXU operands, bf16 intermediate + bf16 output
    # (f32 accumulation / BN statistics) vs the f32 reference.
    assert jnp.allclose(out, ref, rtol=4e-2, atol=4e-2), \
        float(jnp.max(jnp.abs(out - ref)))

    print("KERNEL_OK")
</pallas_src>

<mosaic_0001>
module attributes {stable_mosaic.version = 11 : i64} {
  func.func @_conv3x3_stats_kernel(%arg0: i32, %arg1: i32, %arg2: memref<256x128xbf16, #tpu.memory_space<vmem>>, %arg3: memref<128x128xbf16, #tpu.memory_space<vmem>>, %arg4: memref<256x128xbf16, #tpu.memory_space<vmem>>, %arg5: memref<1x1x128xf32, #tpu.memory_space<vmem>>, %arg6: memref<1x1x128xf32, #tpu.memory_space<vmem>>, %arg7: memref<256x128xf32, #tpu.memory_space<vmem>>) attributes {dimension_semantics = [#tpu.dimension_semantics<parallel>, #tpu.dimension_semantics<arbitrary>], iteration_bounds = array<i64: 2, 1>, scalar_prefetch = 0 : i64, scratch_operands = 1 : i64, tpu.core_type = #tpu.core_type<tc>, window_params = [{transform_indices = @transform_0, window_bounds = array<i64: 256, 128>}, {pipeline_mode = #tpu.pipeline_mode<synchronous>, transform_indices = @transform_1, window_bounds = array<i64: 128, 128>}, {transform_indices = @transform_2, window_bounds = array<i64: 256, 128>}, {transform_indices = @transform_3, window_bounds = array<i64: 1, 1, 128>}, {transform_indices = @transform_4, window_bounds = array<i64: 1, 1, 128>}]} {
    %c0_i32 = arith.constant 0 : i32
    %0 = arith.cmpi eq, %arg1, %c0_i32 : i32
    %1 = arith.extui %0 : i1 to i32
    %c0_i32_0 = arith.constant 0 : i32
    %2 = arith.cmpi ne, %1, %c0_i32_0 : i32
    scf.if %2 {
      %cst_10 = arith.constant 0.000000e+00 : f32
      %12 = vector.broadcast %cst_10 : f32 to vector<256x128xf32>
      %c0_11 = arith.constant 0 : index
      %c0_12 = arith.constant 0 : index
      %13 = vector.load %arg7[%c0_11, %c0_12] : memref<256x128xf32, #tpu.memory_space<vmem>>, vector<256x128xf32>
      tpu.vector_store %arg7[%c0_11, %c0_12], %12 {strides = array<i32>} : memref<256x128xf32, #tpu.memory_space<vmem>>, vector<256x128xf32>,
    } else {
    }
    %c0 = arith.constant 0 : index
    %c0_1 = arith.constant 0 : index
    %3 = vector.load %arg7[%c0, %c0_1] : memref<256x128xf32, #tpu.memory_space<vmem>>, vector<256x128xf32>
    %c0_2 = arith.constant 0 : index
    %c0_3 = arith.constant 0 : index
    %4 = vector.load %arg2[%c0_2, %c0_3] : memref<256x128xbf16, #tpu.memory_space<vmem>>, vector<256x128xbf16>
    %c0_4 = arith.constant 0 : index
    %c0_5 = arith.constant 0 : index
    %5 = vector.load %arg3[%c0_4, %c0_5] : memref<128x128xbf16, #tpu.memory_space<vmem>>, vector<128x128xbf16>
    %cst = arith.constant dense<0.000000e+00> : vector<256x128xf32>
    %6 = tpu.matmul %4, %5, %cst {dimension_numbers = #tpu.dot_dimension_numbers<[1], [0], [0], [1], [0, 0, 1, 1], [], []>} : vector<256x128xbf16>, vector<128x128xbf16>, vector<256x128xf32> -> vector<256x128xf32>
    %7 = arith.addf %3, %6 : vector<256x128xf32>
    %c0_6 = arith.constant 0 : index
    %c0_7 = arith.constant 0 : index
    %8 = vector.load %arg7[%c0_6, %c0_7] : memref<256x128xf32, #tpu.memory_space<vmem>>, vector<256x128xf32>
    tpu.vector_store %arg7[%c0_6, %c0_7], %7 {strides = array<i32>} : memref<256x128xf32, #tpu.memory_space<vmem>>, vector<256x128xf32>,
    %c0_i32_8 = arith.constant 0 : i32
    %9 = arith.cmpi eq, %arg1, %c0_i32_8 : i32
    %10 = arith.extui %9 : i1 to i32
    %c0_i32_9 = arith.constant 0 : i32
    %11 = arith.cmpi ne, %10, %c0_i32_9 : i32
    scf.if %11 {
      %c0_10 = arith.constant 0 : index
      %c0_11 = arith.constant 0 : index
      %12 = vector.load %arg7[%c0_10, %c0_11] : memref<256x128xf32, #tpu.memory_space<vmem>>, vector<256x128xf32>
      %13 = arith.truncf %12 : vector<256x128xf32> to vector<256x128xbf16>
      %c0_12 = arith.constant 0 : index
      %c0_13 = arith.constant 0 : index
      %14 = vector.load %arg4[%c0_12, %c0_13] : memref<256x128xbf16, #tpu.memory_space<vmem>>, vector<256x128xbf16>
      tpu.vector_store %arg4[%c0_12, %c0_13], %13 {strides = array<i32>} : memref<256x128xbf16, #tpu.memory_space<vmem>>, vector<256x128xbf16>,
      %cst_14 = arith.constant dense<0.000000e+00> : vector<128xf32>
      %15 = vector.multi_reduction <add>, %12, %cst_14 [0] : vector<256x128xf32> to vector<128xf32>
      %16 = vector.shape_cast %15 : vector<128xf32> to vector<1x128xf32>
      %17 = arith.mulf %12, %12 : vector<256x128xf32>
      %cst_15 = arith.constant dense<0.000000e+00> : vector<128xf32>
      %18 = vector.multi_reduction <add>, %17, %cst_15 [0] : vector<256x128xf32> to vector<128xf32>
      %19 = vector.shape_cast %18 : vector<128xf32> to vector<1x128xf32>
      %20 = vector.shape_cast %16 : vector<1x128xf32> to vector<1x1x128xf32>
      %c0_16 = arith.constant 0 : index
      %c0_17 = arith.constant 0 : index
      %c0_18 = arith.constant 0 : index
      %21 = vector.load %arg5[%c0_16, %c0_17, %c0_18] : memref<1x1x128xf32, #tpu.memory_space<vmem>>, vector<1x1x128xf32>
      tpu.vector_store %arg5[%c0_16, %c0_17, %c0_18], %20 {strides = array<i32>} : memref<1x1x128xf32, #tpu.memory_space<vmem>>, vector<1x1x128xf32>,
      %22 = vector.shape_cast %19 : vector<1x128xf32> to vector<1x1x128xf32>
      %c0_19 = arith.constant 0 : index
      %c0_20 = arith.constant 0 : index
      %c0_21 = arith.constant 0 : index
      %23 = vector.load %arg6[%c0_19, %c0_20, %c0_21] : memref<1x1x128xf32, #tpu.memory_space<vmem>>, vector<1x1x128xf32>
      tpu.vector_store %arg6[%c0_19, %c0_20, %c0_21], %22 {strides = array<i32>} : memref<1x1x128xf32, #tpu.memory_space<vmem>>, vector<1x1x128xf32>,
    } else {
    }
    return
  }
  func.func @transform_0(%arg0: i32, %arg1: i32) -> (i32, i32) {
    %c0_i32 = arith.constant 0 : i32
    return %arg0, %arg1 : i32, i32
  }
  func.func @transform_1(%arg0: i32, %arg1: i32) -> (i32, i32) {
    %c0_i32 = arith.constant 0 : i32
    %c0_i32_0 = arith.constant 0 : i32
    return %arg1, %c0_i32 : i32, i32
  }
  func.func @transform_2(%arg0: i32, %arg1: i32) -> (i32, i32) {
    %c0_i32 = arith.constant 0 : i32
    %c0_i32_0 = arith.constant 0 : i32
    return %arg0, %c0_i32 : i32, i32
  }
  func.func @transform_3(%arg0: i32, %arg1: i32) -> (i32, i32, i32) {
    %c0_i32 = arith.constant 0 : i32
    %c0_i32_0 = arith.constant 0 : i32
    %c0_i32_1 = arith.constant 0 : i32
    return %arg0, %c0_i32, %c0_i32_0 : i32, i32, i32
  }
  func.func @transform_4(%arg0: i32, %arg1: i32) -> (i32, i32, i32) {
    %c0_i32 = arith.constant 0 : i32
    %c0_i32_0 = arith.constant 0 : i32
    %c0_i32_1 = arith.constant 0 : i32
    return %arg0, %c0_i32, %c0_i32_0 : i32, i32, i32
  }
}

module attributes {stable_mosaic.version = 11 : i64} {
  func.func @_conv3x3_stats_kernel(%arg0: i32, %arg1: i32, %arg2: memref<256x128xbf16, #tpu.memory_space<vmem>>, %arg3: memref<128x128xbf16, #tpu.memory_space<vmem>>, %arg4: memref<256x128xbf16, #tpu.memory_space<vmem>>, %arg5: memref<1x1x128xf32, #tpu.memory_space<vmem>>, %arg6: memref<1x1x128xf32, #tpu.memory_space<vmem>>, %arg7: memref<256x128xf32, #tpu.memory_space<vmem>>) attributes {dimension_semantics = [#tpu.dimension_semantics<parallel>, #tpu.dimension_semantics<arbitrary>], iteration_bounds = array<i64: 2, 1>, scalar_prefetch = 0 : i64, scratch_operands = 1 : i64, tpu.core_type = #tpu.core_type<tc>, window_params = [{transform_indices = @transform_0, window_bounds = array<i64: 256, 128>}, {transform_indices = @transform_1, window_bounds = array<i64: 128, 128>}, {transform_indices = @transform_2, window_bounds = array<i64: 256, 128>}, {transform_indices = @transform_3, window_bounds = array<i64: 1, 1, 128>}, {transform_indices = @transform_4, window_bounds = array<i64: 1, 1, 128>}]} {
    %c0_i32 = arith.constant 0 : i32
    %0 = arith.cmpi eq, %arg1, %c0_i32 : i32
    %1 = arith.extui %0 : i1 to i32
    %c0_i32_0 = arith.constant 0 : i32
    %2 = arith.cmpi ne, %1, %c0_i32_0 : i32
    scf.if %2 {
      %cst_10 = arith.constant 0.000000e+00 : f32
      %12 = vector.broadcast %cst_10 : f32 to vector<256x128xf32>
      %c0_11 = arith.constant 0 : index
      %c0_12 = arith.constant 0 : index
      %13 = vector.load %arg7[%c0_11, %c0_12] : memref<256x128xf32, #tpu.memory_space<vmem>>, vector<256x128xf32>
      tpu.vector_store %arg7[%c0_11, %c0_12], %12 {strides = array<i32>} : memref<256x128xf32, #tpu.memory_space<vmem>>, vector<256x128xf32>,
    } else {
    }
    %c0 = arith.constant 0 : index
    %c0_1 = arith.constant 0 : index
    %3 = vector.load %arg7[%c0, %c0_1] : memref<256x128xf32, #tpu.memory_space<vmem>>, vector<256x128xf32>
    %c0_2 = arith.constant 0 : index
    %c0_3 = arith.constant 0 : index
    %4 = vector.load %arg2[%c0_2, %c0_3] : memref<256x128xbf16, #tpu.memory_space<vmem>>, vector<256x128xbf16>
    %c0_4 = arith.constant 0 : index
    %c0_5 = arith.constant 0 : index
    %5 = vector.load %arg3[%c0_4, %c0_5] : memref<128x128xbf16, #tpu.memory_space<vmem>>, vector<128x128xbf16>
    %cst = arith.constant dense<0.000000e+00> : vector<256x128xf32>
    %6 = tpu.matmul %4, %5, %cst {dimension_numbers = #tpu.dot_dimension_numbers<[1], [0], [0], [1], [0, 0, 1, 1], [], []>} : vector<256x128xbf16>, vector<128x128xbf16>, vector<256x128xf32> -> vector<256x128xf32>
    %7 = arith.addf %3, %6 : vector<256x128xf32>
    %c0_6 = arith.constant 0 : index
    %c0_7 = arith.constant 0 : index
    %8 = vector.load %arg7[%c0_6, %c0_7] : memref<256x128xf32, #tpu.memory_space<vmem>>, vector<256x128xf32>
    tpu.vector_store %arg7[%c0_6, %c0_7], %7 {strides = array<i32>} : memref<256x128xf32, #tpu.memory_space<vmem>>, vector<256x128xf32>,
    %c0_i32_8 = arith.constant 0 : i32
    %9 = arith.cmpi eq, %arg1, %c0_i32_8 : i32
    %10 = arith.extui %9 : i1 to i32
    %c0_i32_9 = arith.constant 0 : i32
    %11 = arith.cmpi ne, %10, %c0_i32_9 : i32
    scf.if %11 {
      %c0_10 = arith.constant 0 : index
      %c0_11 = arith.constant 0 : index
      %12 = vector.load %arg7[%c0_10, %c0_11] : memref<256x128xf32, #tpu.memory_space<vmem>>, vector<256x128xf32>
      %13 = arith.truncf %12 : vector<256x128xf32> to vector<256x128xbf16>
      %c0_12 = arith.constant 0 : index
      %c0_13 = arith.constant 0 : index
      %14 = vector.load %arg4[%c0_12, %c0_13] : memref<256x128xbf16, #tpu.memory_space<vmem>>, vector<256x128xbf16>
      tpu.vector_store %arg4[%c0_12, %c0_13], %13 {strides = array<i32>} : memref<256x128xbf16, #tpu.memory_space<vmem>>, vector<256x128xbf16>,
      %cst_14 = arith.constant dense<0.000000e+00> : vector<128xf32>
      %15 = vector.multi_reduction <add>, %12, %cst_14 [0] : vector<256x128xf32> to vector<128xf32>
      %16 = vector.shape_cast %15 : vector<128xf32> to vector<1x128xf32>
      %17 = arith.mulf %12, %12 : vector<256x128xf32>
      %cst_15 = arith.constant dense<0.000000e+00> : vector<128xf32>
      %18 = vector.multi_reduction <add>, %17, %cst_15 [0] : vector<256x128xf32> to vector<128xf32>
      %19 = vector.shape_cast %18 : vector<128xf32> to vector<1x128xf32>
      %20 = vector.shape_cast %16 : vector<1x128xf32> to vector<1x1x128xf32>
      %c0_16 = arith.constant 0 : index
      %c0_17 = arith.constant 0 : index
      %c0_18 = arith.constant 0 : index
      %21 = vector.load %arg5[%c0_16, %c0_17, %c0_18] : memref<1x1x128xf32, #tpu.memory_space<vmem>>, vector<1x1x128xf32>
      tpu.vector_store %arg5[%c0_16, %c0_17, %c0_18], %20 {strides = array<i32>} : memref<1x1x128xf32, #tpu.memory_space<vmem>>, vector<1x1x128xf32>,
      %22 = vector.shape_cast %19 : vector<1x128xf32> to vector<1x1x128xf32>
      %c0_19 = arith.constant 0 : index
      %c0_20 = arith.constant 0 : index
      %c0_21 = arith.constant 0 : index
      %23 = vector.load %arg6[%c0_19, %c0_20, %c0_21] : memref<1x1x128xf32, #tpu.memory_space<vmem>>, vector<1x1x128xf32>
      tpu.vector_store %arg6[%c0_19, %c0_20, %c0_21], %22 {strides = array<i32>} : memref<1x1x128xf32, #tpu.memory_space<vmem>>, vector<1x1x128xf32>,
    } else {
    }
    return
  }
  func.func @transform_0(%arg0: i32, %arg1: i32) -> (i32, i32) {
    %c0_i32 = arith.constant 0 : i32
    return %arg0, %arg1 : i32, i32
  }
  func.func @transform_1(%arg0: i32, %arg1: i32) -> (i32, i32) {
    %c0_i32 = arith.constant 0 : i32
    %c0_i32_0 = arith.constant 0 : i32
    return %arg1, %c0_i32 : i32, i32
  }
  func.func @transform_2(%arg0: i32, %arg1: i32) -> (i32, i32) {
    %c0_i32 = arith.constant 0 : i32
    %c0_i32_0 = arith.constant 0 : i32
    return %arg0, %c0_i32 : i32, i32
  }
  func.func @transform_3(%arg0: i32, %arg1: i32) -> (i32, i32, i32) {
    %c0_i32 = arith.constant 0 : i32
    %c0_i32_0 = arith.constant 0 : i32
    %c0_i32_1 = arith.constant 0 : i32
    return %arg0, %c0_i32, %c0_i32_0 : i32, i32, i32
  }
  func.func @transform_4(%arg0: i32, %arg1: i32) -> (i32, i32, i32) {
    %c0_i32 = arith.constant 0 : i32
    %c0_i32_0 = arith.constant 0 : i32
    %c0_i32_1 = arith.constant 0 : i32
    return %arg0, %c0_i32, %c0_i32_0 : i32, i32, i32
  }
}

</mosaic_0001>

<llo_original>
// kernel: tpu_custom_call.1
$region0: #{tpu_custom_call.1}
  #allocation0 [shape = 'u32[]', space=smem, size = 0x4, offset = 0x4, fixed_abs, tag = 'smem constant byte address 0x4 - core index']
  #allocation1 [shape = 'u32[144,128]{1,0:T(1,128)}', space=vmem, size = 0x12000, scoped, tag = 'internal scratch']
  #allocation2 [shape = 'f32[256,128]{1,0:T(8,128)}', space=vmem, size = 0x20000, scoped, tag = 'scratch operand']
  %s0 = inlined_call_operand.hbm [shape: bf16[512,128], index: 0, kind: input, shape index: {}]
  %s1 = inlined_call_operand.hbm [shape: bf16[128,128], index: 1, kind: input, shape index: {}]
  %s2 = inlined_call_operand.hbm [shape: bf16[512,128], index: 2, kind: output, shape index: {0}]
  %s3 = inlined_call_operand.hbm [shape: f32[2,1,128], index: 3, kind: output, shape index: {1}]
  %s4 = inlined_call_operand.hbm [shape: f32[2,1,128], index: 4, kind: output, shape index: {2}]
  %5 = xla_tuple %s2, %s3, %s4
  %s6 = sld [smem:[#allocation0]]
  $region73: #{tpu_custom_call.1} parent=0
    _
  %s8 = ssub.s32 1, %s6
  %s9 = scalar_select 0, %s8, %s6
  $region1: #{tpu_custom_call.1} parent=0
    #allocation3 [shape = 'u8[131072]{0}', space=vmem, size = 0x20000, scoped, tag = 'input window, operand 0']
    #allocation4 [shape = 's32[2]{0}', space=sflag, size = 0x8, scoped, tag = 'scoped memory for tpu_custom_call.1']
    #allocation5 [shape = 's32[2]{0}', space=sflag, size = 0x8, scoped, tag = 'scoped memory for tpu_custom_call.1']
    #allocation6 [shape = 'u8[32768]{0}', space=vmem, size = 0x8000, scoped, tag = 'input window, operand 1, single buffered']
    #allocation7 [shape = 's32[1]{0}', space=sflag, size = 0x4, scoped, tag = 'scoped memory for tpu_custom_call.1']
    #allocation8 [shape = 'u8[131072]{0}', space=vmem, size = 0x20000, scoped, tag = 'output window, operand 0']
    #allocation9 [shape = 'u8[1024]{0}', space=vmem, size = 0x400, scoped, tag = 'output window, operand 1']
    #allocation10 [shape = 's32[2]{0}', space=sflag, size = 0x8, scoped, tag = 'scoped memory for tpu_custom_call.1']
    #allocation11 [shape = 'u8[1024]{0}', space=vmem, size = 0x400, scoped, tag = 'output window, operand 2']
    %10 = vsyncpa [#allocation4], 0
    %s11 = scalar_lea.sflag [#allocation4], 1
    %12 = vsyncpa %s11, 0
    %13 = vsyncpa [#allocation7], 0
    %14 = vsyncpa [#allocation5], 0
    %s15 = scalar_lea.sflag [#allocation5], 1
    %16 = vsyncpa %s15, 0
    %17 = vsyncpa [#allocation10], 0
    %s18 = scalar_lea.sflag [#allocation10], 1
    %19 = vsyncpa %s18, 0
    loop: start=0, step=1, limit=4
    $region2: #{tpu_custom_call.1} parent=1 // loop_pre_header
      _
    $region3: #{tpu_custom_call.1} parent=1 // loop_header
      %s21 = sphi 0, %s25
      %p22 = scmp.ge.s32.totalorder %s21, 4
      %s28 = sphi 0, %s40
      %s29 = sphi 0, %s36
      %s30 = sphi 0, %s28
      %s31 = sphi 0, %s29
      %s32 = sphi 0, %s30
      %s33 = sphi 0, %s31
      %s45 = sphi 0, %s47
      %s48 = sphi 0, %s45
      %s49 = sphi 0, %s48
      %s65 = sphi 0, %s49
      %s71 = sphi 0, %s73
      %s74 = sphi 0, %s71
      %s75 = sphi 0, %s74
      %s91 = sphi 0, %s75
      %s97 = sphi 0, %s99
      %s100 = sphi 0, %s97
      %s101 = sphi 0, %s100
      %s117 = sphi 0, %s101
      %s123 = sphi 0, %s125
      %s126 = sphi 0, %s123
      %s127 = sphi 0, %s126
      %s143 = sphi 0, %s127
      %s149 = sphi 0, %s151
      %s152 = sphi 0, %s149
      %s153 = sphi 0, %s152
      %s169 = sphi 0, %s153
    $region4: #{tpu_custom_call.1} parent=1 // loop_header_branch
      %24 = sbr.rel (%p22) target = $region8
    $region5: #{tpu_custom_call.1} parent=1 // loop_body
      %s26 = ssub.s32 %s21, 1
      %s27 = ssub.s32 %s21, 2
      %s34 = sadd.s32 1, %s29
      %p35 = scmp.ge.s32.totalorder %s34, 1
      %s36 = scalar_select %p35, 0, %s34
      %s37 = sadd.s32 1, %s28
      %s38 = scalar_select %p35, %s37, %s28
      %p39 = scmp.ge.s32.totalorder %s38, 2
      %s40 = scalar_select %p39, 0, %s38
      %s41 = ssub.s32 %s28, %s40
      %s42 = ssub.s32 %s29, %s36
      %s43 = sor.u32 %s41, %s42
      %p44 = scmp.eq.s32.totalorder %s43, 0
      %s46 = sadd.s32 %s45, 1
      %s47 = scalar_select %p44, %s45, %s46
      %p50 = pneg %p44
      %p51 = scmp.eq.s32.totalorder %s21, 1
      %p52 = por %p50, %p51
      %p53 = scmp.ne.s32.totalorder %s45, %s48
      %p54 = scmp.eq.s32.totalorder %s21, 0
      %p55 = por %p53, %p54
      %p56 = scmp.ne.s32.totalorder %s45, %s48
      %p57 = scmp.eq.s32.totalorder %s26, 1
      %p58 = por %p56, %p57
      %p59 = scmp.ne.s32.totalorder %s48, %s49
      %p60 = scmp.eq.s32.totalorder %s26, 0
      %p61 = por %p59, %p60
      %p62 = scmp.ne.s32.totalorder %s48, %s49
      %p63 = scmp.eq.s32.totalorder %s27, 1
      %p64 = por %p62, %p63
      %p66 = scmp.ne.s32.totalorder %s49, %s65
      %p67 = scmp.eq.s32.totalorder %s27, 0
      %p68 = por %p66, %p67
      %s69 = ssub.s32 %s29, %s36
      %p70 = scmp.eq.s32.totalorder %s69, 0
      %s72 = sadd.s32 %s71, 1
      %s73 = scalar_select %p70, %s71, %s72
      %p76 = pneg %p70
      %p77 = scmp.eq.s32.totalorder %s21, 1
      %p78 = por %p76, %p77
      %p79 = scmp.ne.s32.totalorder %s71, %s74
      %p80 = scmp.eq.s32.totalorder %s21, 0
      %p81 = por %p79, %p80
      %p82 = scmp.ne.s32.totalorder %s71, %s74
      %p83 = scmp.eq.s32.totalorder %s26, 1
      %p84 = por %p82, %p83
      %p85 = scmp.ne.s32.totalorder %s74, %s75
      %p86 = scmp.eq.s32.totalorder %s26, 0
      %p87 = por %p85, %p86
      %p88 = scmp.ne.s32.totalorder %s74, %s75
      %p89 = scmp.eq.s32.totalorder %s27, 1
      %p90 = por %p88, %p89
      %p92 = scmp.ne.s32.totalorder %s75, %s91
      %p93 = scmp.eq.s32.totalorder %s27, 0
      %p94 = por %p92, %p93
      %s95 = ssub.s32 %s28, %s40
      %p96 = scmp.eq.s32.totalorder %s95, 0
      %s98 = sadd.s32 %s97, 1
      %s99 = scalar_select %p96, %s97, %s98
      %p102 = pneg %p96
      %p103 = scmp.eq.s32.totalorder %s21, 1
      %p104 = por %p102, %p103
      %p105 = scmp.ne.s32.totalorder %s97, %s100
      %p106 = scmp.eq.s32.totalorder %s21, 0
      %p107 = por %p105, %p106
      %p108 = scmp.ne.s32.totalorder %s97, %s100
      %p109 = scmp.eq.s32.totalorder %s26, 1
      %p110 = por %p108, %p109
      %p111 = scmp.ne.s32.totalorder %s100, %s101
      %p112 = scmp.eq.s32.totalorder %s26, 0
      %p113 = por %p111, %p112
      %p114 = scmp.ne.s32.totalorder %s100, %s101
      %p115 = scmp.eq.s32.totalorder %s27, 1
      %p116 = por %p114, %p115
      %p118 = scmp.ne.s32.totalorder %s101, %s117
      %p119 = scmp.eq.s32.totalorder %s27, 0
      %p120 = por %p118, %p119
      %s121 = ssub.s32 %s28, %s40
      %p122 = scmp.eq.s32.totalorder %s121, 0
      %s124 = sadd.s32 %s123, 1
      %s125 = scalar_select %p122, %s123, %s124
      %p128 = pneg %p122
      %p129 = scmp.eq.s32.totalorder %s21, 1
      %p130 = por %p128, %p129
      %p131 = scmp.ne.s32.totalorder %s123, %s126
      %p132 = scmp.eq.s32.totalorder %s21, 0
      %p133 = por %p131, %p132
      %p134 = scmp.ne.s32.totalorder %s123, %s126
      %p135 = scmp.eq.s32.totalorder %s26, 1
      %p136 = por %p134, %p135
      %p137 = scmp.ne.s32.totalorder %s126, %s127
      %p138 = scmp.eq.s32.totalorder %s26, 0
      %p139 = por %p137, %p138
      %p140 = scmp.ne.s32.totalorder %s126, %s127
      %p141 = scmp.eq.s32.totalorder %s27, 1
      %p142 = por %p140, %p141
      %p144 = scmp.ne.s32.totalorder %s127, %s143
      %p145 = scmp.eq.s32.totalorder %s27, 0
      %p146 = por %p144, %p145
      %s147 = ssub.s32 %s28, %s40
      %p148 = scmp.eq.s32.totalorder %s147, 0
      %s150 = sadd.s32 %s149, 1
      %s151 = scalar_select %p148, %s149, %s150
      %p154 = pneg %p148
      %p155 = scmp.eq.s32.totalorder %s21, 1
      %p156 = por %p154, %p155
      %p157 = scmp.ne.s32.totalorder %s149, %s152
      %p158 = scmp.eq.s32.totalorder %s21, 0
      %p159 = por %p157, %p158
      %p160 = scmp.ne.s32.totalorder %s149, %s152
      %p161 = scmp.eq.s32.totalorder %s26, 1
      %p162 = por %p160, %p161
      %p163 = scmp.ne.s32.totalorder %s152, %s153
      %p164 = scmp.eq.s32.totalorder %s26, 0
      %p165 = por %p163, %p164
      %p166 = scmp.ne.s32.totalorder %s152, %s153
      %p167 = scmp.eq.s32.totalorder %s27, 1
      %p168 = por %p166, %p167
      %p170 = scmp.ne.s32.totalorder %s153, %s169
      %p171 = scmp.eq.s32.totalorder %s27, 0
      %p172 = por %p170, %p171
      %p173 = scmp.le.s32.totalorder 1, %s21
      %p174 = scmp.lt.s32.totalorder %s21, 3
      %p175 = pnand %p173, %p174
      %p176 = pneg %p175
      // Predicated region
      $region9: #{tpu_custom_call.1} parent=5 // pred_check
        _
      $region10: #{tpu_custom_call.1} parent=5 // pred_check_branch
        %178 = sbr.rel (%p175) target = $region12
      $region11: #{tpu_custom_call.1} parent=5 // pred_region
        %s179 = ssub.s32 %s21, 1
        // Predicated region
        $region13: #{tpu_custom_call.1} parent=11 // pred_check
          %p180 = pneg %p87
        $region14: #{tpu_custom_call.1} parent=11 // pred_check_branch
          %182 = sbr.rel (%p180) target = $region16
        $region15: #{tpu_custom_call.1} parent=11 // pred_region
          %s183 = smul.u32 16, %s31
          %s185 = ssub.s32 1024, 1024
          %186 = vsyncadd [#allocation7], %s185
          %s187 = smul.addr %s183, 64
          %s188 = scalar_lea.hbm %s1, %s187
          %s189 = sshll.u32 [#allocation6], 4
          %s190 = int_to_ptr.vmem [resolvable:$true] %s189
          %195 = dma.hbm_to_vmem [thread:$0]  %s188, 1024, %s190, [#allocation7], 64, 64, 4
        $region16: #{tpu_custom_call.1} parent=11 // pred_fallthru
          _
      $region12: #{tpu_custom_call.1} parent=5 // pred_fallthru
        _
      %p196 = scmp.lt.s32.totalorder %s21, 2
      // Predicated region
      $region17: #{tpu_custom_call.1} parent=5 // pred_check
        %p197 = pneg %p196
      $region18: #{tpu_custom_call.1} parent=5 // pred_check_branch
        %199 = sbr.rel (%p197) target = $region20
      $region19: #{tpu_custom_call.1} parent=5 // pred_region
        // Predicated region
        $region21: #{tpu_custom_call.1} parent=19 // pred_check
          %p200 = pneg %p55
        $region22: #{tpu_custom_call.1} parent=19 // pred_check_branch
          %202 = sbr.rel (%p200) target = $region24
        $region23: #{tpu_custom_call.1} parent=19 // pred_region
          %s203 = sand.u32 %s45, 1
          %s204 = scalar_lea.sflag [#allocation4], %s203
          %s205 = sand.u32 %s45, 1
          %s206 = smul.addr %s205, 128
          %s207 = scalar_lea.vmem [#allocation3], %s206
          %s208 = smul.u32 32, %s28
          %s210 = ssub.s32 2048, 2048
          %211 = vsyncadd %s204, %s210
          %s212 = sadd.s32 %s29, %s208
          %s213 = smul.addr %s212, 64
          %s214 = scalar_lea.hbm %s0, %s213
          %s215 = sshll.u32 %s207, 4
          %s216 = int_to_ptr.vmem [resolvable:$true] %s215
          %221 = dma.hbm_to_vmem [thread:$0]  %s214, 2048, %s216, %s204, 64, 64, 4
        $region24: #{tpu_custom_call.1} parent=19 // pred_fallthru
          _
      $region20: #{tpu_custom_call.1} parent=5 // pred_fallthru
        _
      %p222 = scmp.le.s32.totalorder 1, %s21
      %p223 = scmp.lt.s32.totalorder %s21, 3
      %p224 = pnand %p222, %p223
      %p225 = pneg %p224
      // Predicated region
      $region25: #{tpu_custom_call.1} parent=5 // pred_check
        _
      $region26: #{tpu_custom_call.1} parent=5 // pred_check_branch
        %227 = sbr.rel (%p224) target = $region28
      $region27: #{tpu_custom_call.1} parent=5 // pred_region
        %s228 = ssub.s32 %s21, 1
        %s229 = sand.u32 %s48, 1
        %s230 = scalar_lea.sflag [#allocation4], %s229
        %s231 = sand.u32 %s48, 1
        %s232 = smul.addr %s231, 128
        %s233 = scalar_lea.vmem [#allocation3], %s232
        // Predicated region
        $region29: #{tpu_custom_call.1} parent=27 // pred_check
          %p234 = pneg %p61
        $region30: #{tpu_custom_call.1} parent=27 // pred_check_branch
          %236 = sbr.rel (%p234) target = $region32
        $region31: #{tpu_custom_call.1} parent=27 // pred_region
          %237 = dma.done %s230, 2048
        $region32: #{tpu_custom_call.1} parent=27 // pred_fallthru
          _
        // Predicated region
        $region33: #{tpu_custom_call.1} parent=27 // pred_check
          %p238 = pneg %p87
        $region34: #{tpu_custom_call.1} parent=27 // pred_check_branch
          %240 = sbr.rel (%p238) target = $region36
        $region35: #{tpu_custom_call.1} parent=27 // pred_region
          %241 = dma.done [#allocation7], 1024
        $region36: #{tpu_custom_call.1} parent=27 // pred_fallthru
          _
        %s242 = sand.u32 %s48, 1
        %s243 = scalar_lea.sflag [#allocation4], %s242
        %s244 = sand.u32 %s48, 1
        %s245 = smul.addr %s244, 128
        %s246 = scalar_lea.vmem [#allocation3], %s245
        %p247 = pneg %p61
        %p248 = pneg %p58
        %p249 = pneg %p87
        %p250 = pneg %p84
        %p251 = pneg %p113
        %p252 = pneg %p110
        %s253 = sand.u32 %s100, 1
        %s254 = scalar_lea.sflag [#allocation5], %s253
        %s255 = sand.u32 %s100, 1
        %s256 = smul.addr %s255, 128
        %s257 = scalar_lea.vmem [#allocation8], %s256
        %p258 = pneg %p139
        %p259 = pneg %p136
        %s260 = sand.u32 %s26, 1
        %s261 = scalar_lea.sflag [#allocation10], %s260
        %s262 = sand.u32 %s126, 1
        %s263 = scalar_lea.vmem [#allocation9], %s262
        %p264 = pneg %p165
        %p265 = pneg %p162
        %s266 = sand.u32 %s26, 1
        %s267 = scalar_lea.sflag [#allocation10], %s266
        %s268 = sand.u32 %s152, 1
        %s269 = scalar_lea.vmem [#allocation11], %s268
        %s270 = smul.u32 32, %s30
        %s271 = smul.u32 16, %s31
        %s272 = smul.u32 32, %s30
        %p274 = scmp.eq.s32.totalorder %s31, 0
        // Predicated region
        $region37: #{tpu_custom_call.1} parent=27 // pred_check
          %p275 = pneg %p274
        $region38: #{tpu_custom_call.1} parent=27 // pred_check_branch
          %277 = sbr.rel (%p275) target = $region40
        $region39: #{tpu_custom_call.1} parent=27 // pred_region
          %278 = vst [vmem:[#allocation2] sm:$0xff] 0.0
          %279 = vst [vmem:[#allocation2 + $0x8] sm:$0xff] 0.0
          %280 = vst [vmem:[#allocation2 + $0x10] sm:$0xff] 0.0
          %281 = vst [vmem:[#allocation2 + $0x18] sm:$0xff] 0.0
          %282 = vst [vmem:[#allocation2 + $0x20] sm:$0xff] 0.0
          %283 = vst [vmem:[#allocation2 + $0x28] sm:$0xff] 0.0
          %284 = vst [vmem:[#allocation2 + $0x30] sm:$0xff] 0.0
          %285 = vst [vmem:[#allocation2 + $0x38] sm:$0xff] 0.0
          %286 = vst [vmem:[#allocation2 + $0x40] sm:$0xff] 0.0
          %287 = vst [vmem:[#allocation2 + $0x48] sm:$0xff] 0.0
          %288 = vst [vmem:[#allocation2 + $0x50] sm:$0xff] 0.0
          %289 = vst [vmem:[#allocation2 + $0x58] sm:$0xff] 0.0
          %290 = vst [vmem:[#allocation2 + $0x60] sm:$0xff] 0.0
          %291 = vst [vmem:[#allocation2 + $0x68] sm:$0xff] 0.0
          %292 = vst [vmem:[#allocation2 + $0x70] sm:$0xff] 0.0
          %293 = vst [vmem:[#allocation2 + $0x78] sm:$0xff] 0.0
          %294 = vst [vmem:[#allocation2 + $0x80] sm:$0xff] 0.0
          %295 = vst [vmem:[#allocation2 + $0x88] sm:$0xff] 0.0
          %296 = vst [vmem:[#allocation2 + $0x90] sm:$0xff] 0.0
          %297 = vst [vmem:[#allocation2 + $0x98] sm:$0xff] 0.0
          %298 = vst [vmem:[#allocation2 + $0xa0] sm:$0xff] 0.0
          %299 = vst [vmem:[#allocation2 + $0xa8] sm:$0xff] 0.0
          %300 = vst [vmem:[#allocation2 + $0xb0] sm:$0xff] 0.0
          %301 = vst [vmem:[#allocation2 + $0xb8] sm:$0xff] 0.0
          %302 = vst [vmem:[#allocation2 + $0xc0] sm:$0xff] 0.0
          %303 = vst [vmem:[#allocation2 + $0xc8] sm:$0xff] 0.0
          %304 = vst [vmem:[#allocation2 + $0xd0] sm:$0xff] 0.0
          %305 = vst [vmem:[#allocation2 + $0xd8] sm:$0xff] 0.0
          %306 = vst [vmem:[#allocation2 + $0xe0] sm:$0xff] 0.0
          %307 = vst [vmem:[#allocation2 + $0xe8] sm:$0xff] 0.0
          %308 = vst [vmem:[#allocation2 + $0xf0] sm:$0xff] 0.0
          %309 = vst [vmem:[#allocation2 + $0xf8] sm:$0xff] 0.0
        $region40: #{tpu_custom_call.1} parent=27 // pred_fallthru
          _
        %v310 = vld [vmem:[#allocation2] sm:$0xff]
        %v311 = vld [vmem:[#allocation2 + $0x8] sm:$0xff]
        %v312 = vld [vmem:[#allocation2 + $0x10] sm:$0xff]
        %v313 = vld [vmem:[#allocation2 + $0x18] sm:$0xff]
        %v314 = vld [vmem:[#allocation2 + $0x20] sm:$0xff]
        %v315 = vld [vmem:[#allocation2 + $0x28] sm:$0xff]
        %v316 = vld [vmem:[#allocation2 + $0x30] sm:$0xff]
        %v317 = vld [vmem:[#allocation2 + $0x38] sm:$0xff]
        %v318 = vld [vmem:[#allocation2 + $0x40] sm:$0xff]
        %v319 = vld [vmem:[#allocation2 + $0x48] sm:$0xff]
        %v320 = vld [vmem:[#allocation2 + $0x50] sm:$0xff]
        %v321 = vld [vmem:[#allocation2 + $0x58] sm:$0xff]
        %v322 = vld [vmem:[#allocation2 + $0x60] sm:$0xff]
        %v323 = vld [vmem:[#allocation2 + $0x68] sm:$0xff]
        %v324 = vld [vmem:[#allocation2 + $0x70] sm:$0xff]
        %v325 = vld [vmem:[#allocation2 + $0x78] sm:$0xff]
        %v326 = vld [vmem:[#allocation2 + $0x80] sm:$0xff]
        %v327 = vld [vmem:[#allocation2 + $0x88] sm:$0xff]
        %v328 = vld [vmem:[#allocation2 + $0x90] sm:$0xff]
        %v329 = vld [vmem:[#allocation2 + $0x98] sm:$0xff]
        %v330 = vld [vmem:[#allocation2 + $0xa0] sm:$0xff]
        %v331 = vld [vmem:[#allocation2 + $0xa8] sm:$0xff]
        %v332 = vld [vmem:[#allocation2 + $0xb0] sm:$0xff]
        %v333 = vld [vmem:[#allocation2 + $0xb8] sm:$0xff]
        %v334 = vld [vmem:[#allocation2 + $0xc0] sm:$0xff]
        %v335 = vld [vmem:[#allocation2 + $0xc8] sm:$0xff]
        %v336 = vld [vmem:[#allocation2 + $0xd0] sm:$0xff]
        %v337 = vld [vmem:[#allocation2 + $0xd8] sm:$0xff]
        %v338 = vld [vmem:[#allocation2 + $0xe0] sm:$0xff]
        %v339 = vld [vmem:[#allocation2 + $0xe8] sm:$0xff]
        %v340 = vld [vmem:[#allocation2 + $0xf0] sm:$0xff]
        %v341 = vld [vmem:[#allocation2 + $0xf8] sm:$0xff]
        %v342 = vld [vmem:[%s233] sm:$0xf]
        %v343 = vld [vmem:[%s233 + $0x4] sm:$0xf]
        %v344 = vld [vmem:[%s233 + $0x8] sm:$0xf]
        %v345 = vld [vmem:[%s233 + $0xc] sm:$0xf]
        %v346 = vld [vmem:[%s233 + $0x10] sm:$0xf]
        %v347 = vld [vmem:[%s233 + $0x14] sm:$0xf]
        %v348 = vld [vmem:[%s233 + $0x18] sm:$0xf]
        %v349 = vld [vmem:[%s233 + $0x1c] sm:$0xf]
        %v350 = vld [vmem:[%s233 + $0x20] sm:$0xf]
        %v351 = vld [vmem:[%s233 + $0x24] sm:$0xf]
        %v352 = vld [vmem:[%s233 + $0x28] sm:$0xf]
        %v353 = vld [vmem:[%s233 + $0x2c] sm:$0xf]
        %v354 = vld [vmem:[%s233 + $0x30] sm:$0xf]
        %v355 = vld [vmem:[%s233 + $0x34] sm:$0xf]
        %v356 = vld [vmem:[%s233 + $0x38] sm:$0xf]
        %v357 = vld [vmem:[%s233 + $0x3c] sm:$0xf]
        %v358 = vld [vmem:[%s233 + $0x40] sm:$0xf]
        %v359 = vld [vmem:[%s233 + $0x44] sm:$0xf]
        %v360 = vld [vmem:[%s233 + $0x48] sm:$0xf]
        %v361 = vld [vmem:[%s233 + $0x4c] sm:$0xf]
        %v362 = vld [vmem:[%s233 + $0x50] sm:$0xf]
        %v363 = vld [vmem:[%s233 + $0x54] sm:$0xf]
        %v364 = vld [vmem:[%s233 + $0x58] sm:$0xf]
        %v365 = vld [vmem:[%s233 + $0x5c] sm:$0xf]
        %v366 = vld [vmem:[%s233 + $0x60] sm:$0xf]
        %v367 = vld [vmem:[%s233 + $0x64] sm:$0xf]
        %v368 = vld [vmem:[%s233 + $0x68] sm:$0xf]
        %v369 = vld [vmem:[%s233 + $0x6c] sm:$0xf]
        %v370 = vld [vmem:[%s233 + $0x70] sm:$0xf]
        %v371 = vld [vmem:[%s233 + $0x74] sm:$0xf]
        %v372 = vld [vmem:[%s233 + $0x78] sm:$0xf]
        %v373 = vld [vmem:[%s233 + $0x7c] sm:$0xf]
        %v374 = vld [vmem:[#allocation6] sm:$0xf]
        %v375 = vld [vmem:[#allocation6 + $0x4] sm:$0xf]
        %v376 = vld [vmem:[#allocation6 + $0x8] sm:$0xf]
        %v377 = vld [vmem:[#allocation6 + $0xc] sm:$0xf]
        %v378 = vld [vmem:[#allocation6 + $0x10] sm:$0xf]
        %v379 = vld [vmem:[#allocation6 + $0x14] sm:$0xf]
        %v380 = vld [vmem:[#allocation6 + $0x18] sm:$0xf]
        %v381 = vld [vmem:[#allocation6 + $0x1c] sm:$0xf]
        %v382 = vld [vmem:[#allocation6 + $0x20] sm:$0xf]
        %v383 = vld [vmem:[#allocation6 + $0x24] sm:$0xf]
        %v384 = vld [vmem:[#allocation6 + $0x28] sm:$0xf]
        %v385 = vld [vmem:[#allocation6 + $0x2c] sm:$0xf]
        %v386 = vld [vmem:[#allocation6 + $0x30] sm:$0xf]
        %v387 = vld [vmem:[#allocation6 + $0x34] sm:$0xf]
        %v388 = vld [vmem:[#allocation6 + $0x38] sm:$0xf]
        %v389 = vld [vmem:[#allocation6 + $0x3c] sm:$0xf]
        %v422 = vunpack.c.l.b16 %v342
        %v423 = vunpack.c.l.b16 %v343
        %v424 = vunpack.c.l.b16 %v344
        %v425 = vunpack.c.l.b16 %v345
        %v426 = vunpack.c.l.b16 %v346
        %v427 = vunpack.c.l.b16 %v347
        %v428 = vunpack.c.l.b16 %v348
        %v429 = vunpack.c.l.b16 %v349
        %v430 = vunpack.c.l.b16 %v350
        %v431 = vunpack.c.l.b16 %v351
        %v432 = vunpack.c.l.b16 %v352
        %v433 = vunpack.c.l.b16 %v353
        %v434 = vunpack.c.l.b16 %v354
        %v435 = vunpack.c.l.b16 %v355
        %v436 = vunpack.c.l.b16 %v356
        %v437 = vunpack.c.l.b16 %v357
        %v438 = vunpack.c.l.b16 %v358
        %v439 = vunpack.c.l.b16 %v359
        %v440 = vunpack.c.l.b16 %v360
        %v441 = vunpack.c.l.b16 %v361
        %v442 = vunpack.c.l.b16 %v362
        %v443 = vunpack.c.l.b16 %v363
        %v444 = vunpack.c.l.b16 %v364
        %v445 = vunpack.c.l.b16 %v365
        %v446 = vunpack.c.l.b16 %v366
        %v447 = vunpack.c.l.b16 %v367
        %v448 = vunpack.c.l.b16 %v368
        %v449 = vunpack.c.l.b16 %v369
        %v450 = vunpack.c.l.b16 %v370
        %v451 = vunpack.c.l.b16 %v371
        %v452 = vunpack.c.l.b16 %v372
        %v453 = vunpack.c.l.b16 %v373
        %v454 = vpack.c.b16 %v423, %v422
        %v455 = vpack.c.b16 %v425, %v424
        %v456 = vpack.c.b16 %v427, %v426
        %v457 = vpack.c.b16 %v429, %v428
        %v458 = vpack.c.b16 %v431, %v430
        %v459 = vpack.c.b16 %v433, %v432
        %v460 = vpack.c.b16 %v435, %v434
        %v461 = vpack.c.b16 %v437, %v436
        %v462 = vpack.c.b16 %v439, %v438
        %v463 = vpack.c.b16 %v441, %v440
        %v464 = vpack.c.b16 %v443, %v442
        %v465 = vpack.c.b16 %v445, %v444
        %v466 = vpack.c.b16 %v447, %v446
        %v467 = vpack.c.b16 %v449, %v448
        %v468 = vpack.c.b16 %v451, %v450
        %v469 = vpack.c.b16 %v453, %v452
        %v502 = vunpack.c.l.b16 %v374
        %v503 = vunpack.c.l.b16 %v375
        %v504 = vunpack.c.l.b16 %v376
        %v505 = vunpack.c.l.b16 %v377
        %v506 = vunpack.c.l.b16 %v378
        %v507 = vunpack.c.l.b16 %v379
        %v508 = vunpack.c.l.b16 %v380
        %v509 = vunpack.c.l.b16 %v381
        %v510 = vunpack.c.l.b16 %v382
        %v511 = vunpack.c.l.b16 %v383
        %v512 = vunpack.c.l.b16 %v384
        %v513 = vunpack.c.l.b16 %v385
        %v514 = vunpack.c.l.b16 %v386
        %v515 = vunpack.c.l.b16 %v387
        %v516 = vunpack.c.l.b16 %v388
        %v517 = vunpack.c.l.b16 %v389
        %v518 = vpack.c.b16 %v503, %v502
        %v519 = vpack.c.b16 %v505, %v504
        %v520 = vpack.c.b16 %v507, %v506
        %v521 = vpack.c.b16 %v509, %v508
        %v522 = vpack.c.b16 %v511, %v510
        %v523 = vpack.c.b16 %v513, %v512
        %v524 = vpack.c.b16 %v515, %v514
        %v525 = vpack.c.b16 %v517, %v516
        %534 = vmatprep.subr.bf16.mxu0 0
        %535 = vmatpush1.bf16.msra.mxu0 %v518
        %536 = vmatprep.subr.bf16.mxu0 0
        %537 = vmatpush1.bf16.msra.mxu0 %v519
        %538 = vmatprep.subr.bf16.mxu0 0
        %539 = vmatpush1.bf16.msra.mxu0 %v520
        %540 = vmatprep.subr.bf16.mxu0 0
        %541 = vmatpush1.bf16.msra.mxu0 %v521
        %542 = vmatprep.subr.bf16.mxu0 0
        %543 = vmatpush1.bf16.msra.mxu0 %v522
        %544 = vmatprep.subr.bf16.mxu0 0
        %545 = vmatpush1.bf16.msra.mxu0 %v523
        %546 = vmatprep.subr.bf16.mxu0 0
        %547 = vmatpush1.bf16.msra.mxu0 %v524
        %548 = vmatprep.subr.bf16.mxu0 0
        %549 = vmatpush1.bf16.msra.mxu0 %v525
        %550 = vmatprep.subr.bf16.mxu0 0
        %551 = vmatpush1.bf16.msra.mxu0 0
        %552 = vmatprep.subr.bf16.mxu0 0
        %553 = vmatpush1.bf16.msra.mxu0 0
        %554 = vmatprep.subr.bf16.mxu0 0
        %555 = vmatpush1.bf16.msra.mxu0 0
        %556 = vmatprep.subr.bf16.mxu0 0
        %557 = vmatpush1.bf16.msra.mxu0 0
        %558 = vmatprep.subr.bf16.mxu0 0
        %559 = vmatpush1.bf16.msra.mxu0 0
        %560 = vmatprep.subr.bf16.mxu0 0
        %561 = vmatpush1.bf16.msra.mxu0 0
        %562 = vmatprep.subr.bf16.mxu0 0
        %563 = vmatpush1.bf16.msra.mxu0 0
        %564 = vmatprep.subr.bf16.mxu0 0
        %565 = vmatpush1.bf16.msra.mxu0 0
        %566 = vmatprep.mubr.bf16.mxu0 0
        %567 = vmatmul.mubr.bf16.gmra.mrb[0].mxu0 %v454
        %v568 = vpop.f32.mrb[0].mxu0
        %v569 = vadd.f32 0.0, %v568
        %v570 = vpop.f32.mrb[0].mxu0
        %v571 = vpop.f32.mrb[0].mxu0
        %v572 = vadd.f32 0.0, %v571
        %v573 = vpop.f32.mrb[0].mxu0
        %574 = vmatprep.mubr.bf16.mxu0 0
        %575 = vmatmul.mubr.bf16.gmra.mrb[0].mxu0 %v455
        %v576 = vpop.f32.mrb[0].mxu0
        %v577 = vadd.f32 0.0, %v576
        %v578 = vpop.f32.mrb[0].mxu0
        %v579 = vpop.f32.mrb[0].mxu0
        %v580 = vadd.f32 0.0, %v579
        %v581 = vpop.f32.mrb[0].mxu0
        %582 = vmatprep.mubr.bf16.mxu0 0
        %583 = vmatmul.mubr.bf16.gmra.mrb[0].mxu0 %v456
        %v584 = vpop.f32.mrb[0].mxu0
        %v585 = vadd.f32 0.0, %v584
        %v586 = vpop.f32.mrb[0].mxu0
        %v587 = vpop.f32.mrb[0].mxu0
        %v588 = vadd.f32 0.0, %v587
        %v589 = vpop.f32.mrb[0].mxu0
        %590 = vmatprep.mubr.bf16.mxu0 0
        %591 = vmatmul.mubr.bf16.gmra.mrb[0].mxu0 %v457
        %v592 = vpop.f32.mrb[0].mxu0
        %v593 = vadd.f32 0.0, %v592
        %v594 = vpop.f32.mrb[0].mxu0
        %v595 = vpop.f32.mrb[0].mxu0
        %v596 = vadd.f32 0.0, %v595
        %v597 = vpop.f32.mrb[0].mxu0
        %598 = vmatprep.mubr.bf16.mxu0 0
        %599 = vmatmul.mubr.bf16.gmra.mrb[0].mxu0 %v458
        %v600 = vpop.f32.mrb[0].mxu0
        %v601 = vadd.f32 0.0, %v600
        %v602 = vpop.f32.mrb[0].mxu0
        %v603 = vpop.f32.mrb[0].mxu0
        %v604 = vadd.f32 0.0, %v603
        %v605 = vpop.f32.mrb[0].mxu0
        %606 = vmatprep.mubr.bf16.mxu0 0
        %607 = vmatmul.mubr.bf16.gmra.mrb[0].mxu0 %v459
        %v608 = vpop.f32.mrb[0].mxu0
        %v609 = vadd.f32 0.0, %v608
        %v610 = vpop.f32.mrb[0].mxu0
        %v611 = vpop.f32.mrb[0].mxu0
        %v612 = vadd.f32 0.0, %v611
        %v613 = vpop.f32.mrb[0].mxu0
        %614 = vmatprep.mubr.bf16.mxu0 0
        %615 = vmatmul.mubr.bf16.gmra.mrb[0].mxu0 %v460
        %v616 = vpop.f32.mrb[0].mxu0
        %v617 = vadd.f32 0.0, %v616
        %v618 = vpop.f32.mrb[0].mxu0
        %v619 = vpop.f32.mrb[0].mxu0
        %v620 = vadd.f32 0.0, %v619
        %v621 = vpop.f32.mrb[0].mxu0
        %622 = vmatprep.mubr.bf16.mxu0 0
        %623 = vmatmul.mubr.bf16.gmra.mrb[0].mxu0 %v461
        %v624 = vpop.f32.mrb[0].mxu0
        %v625 = vadd.f32 0.0, %v624
        %v626 = vpop.f32.mrb[0].mxu0
        %v627 = vpop.f32.mrb[0].mxu0
        %v628 = vadd.f32 0.0, %v627
        %v629 = vpop.f32.mrb[0].mxu0
        %630 = vmatprep.mubr.bf16.mxu0 0
        %631 = vmatmul.mubr.bf16.gmra.mrb[0].mxu0 %v462
        %v632 = vpop.f32.mrb[0].mxu0
        %v633 = vadd.f32 0.0, %v632
        %v634 = vpop.f32.mrb[0].mxu0
        %v635 = vpop.f32.mrb[0].mxu0
        %v636 = vadd.f32 0.0, %v635
        %v637 = vpop.f32.mrb[0].mxu0
        %638 = vmatprep.mubr.bf16.mxu0 0
        %639 = vmatmul.mubr.bf16.gmra.mrb[0].mxu0 %v463
        %v640 = vpop.f32.mrb[0].mxu0
        %v641 = vadd.f32 0.0, %v640
        %v642 = vpop.f32.mrb[0].mxu0
        %v643 = vpop.f32.mrb[0].mxu0
        %v644 = vadd.f32 0.0, %v643
        %v645 = vpop.f32.mrb[0].mxu0
        %646 = vmatprep.mubr.bf16.mxu0 0
        %647 = vmatmul.mubr.bf16.gmra.mrb[0].mxu0 %v464
        %v648 = vpop.f32.mrb[0].mxu0
        %v649 = vadd.f32 0.0, %v648
        %v650 = vpop.f32.mrb[0].mxu0
        %v651 = vpop.f32.mrb[0].mxu0
        %v652 = vadd.f32 0.0, %v651
        %v653 = vpop.f32.mrb[0].mxu0
        %654 = vmatprep.mubr.bf16.mxu0 0
        %655 = vmatmul.mubr.bf16.gmra.mrb[0].mxu0 %v465
        %v656 = vpop.f32.mrb[0].mxu0
        %v657 = vadd.f32 0.0, %v656
        %v658 = vpop.f32.mrb[0].mxu0
        %v659 = vpop.f32.mrb[0].mxu0
        %v660 = vadd.f32 0.0, %v659
        %v661 = vpop.f32.mrb[0].mxu0
        %662 = vmatprep.mubr.bf16.mxu0 0
        %663 = vmatmul.mubr.bf16.gmra.mrb[0].mxu0 %v466
        %v664 = vpop.f32.mrb[0].mxu0
        %v665 = vadd.f32 0.0, %v664
        %v666 = vpop.f32.mrb[0].mxu0
        %v667 = vpop.f32.mrb[0].mxu0
        %v668 = vadd.f32 0.0, %v667
        %v669 = vpop.f32.mrb[0].mxu0
        %670 = vmatprep.mubr.bf16.mxu0 0
        %671 = vmatmul.mubr.bf16.gmra.mrb[0].mxu0 %v467
        %v672 = vpop.f32.mrb[0].mxu0
        %v673 = vadd.f32 0.0, %v672
        %v674 = vpop.f32.mrb[0].mxu0
        %v675 = vpop.f32.mrb[0].mxu0
        %v676 = vadd.f32 0.0, %v675
        %v677 = vpop.f32.mrb[0].mxu0
        %678 = vmatprep.mubr.bf16.mxu0 0
        %679 = vmatmul.mubr.bf16.gmra.mrb[0].mxu0 %v468
        %v680 = vpop.f32.mrb[0].mxu0
        %v681 = vadd.f32 0.0, %v680
        %v682 = vpop.f32.mrb[0].mxu0
        %v683 = vpop.f32.mrb[0].mxu0
        %v684 = vadd.f32 0.0, %v683
        %v685 = vpop.f32.mrb[0].mxu0
        %686 = vmatprep.mubr.bf16.mxu0 0
        %687 = vmatmul.mubr.bf16.gmra.mrb[0].mxu0 %v469
        %v688 = vpop.f32.mrb[0].mxu0
        %v689 = vadd.f32 0.0, %v688
        %v690 = vpop.f32.mrb[0].mxu0
        %v691 = vpop.f32.mrb[0].mxu0
        %v692 = vadd.f32 0.0, %v691
        %v693 = vpop.f32.mrb[0].mxu0
        %694 = vdwg.mxu0
        %v695 = vadd.f32 %v310, %v569
        %v696 = vadd.f32 %v311, %v572
        %v697 = vadd.f32 %v312, %v577
        %v698 = vadd.f32 %v313, %v580
        %v699 = vadd.f32 %v314, %v585
        %v700 = vadd.f32 %v315, %v588
        %v701 = vadd.f32 %v316, %v593
        %v702 = vadd.f32 %v317, %v596
        %v703 = vadd.f32 %v318, %v601
        %v704 = vadd.f32 %v319, %v604
        %v705 = vadd.f32 %v320, %v609
        %v706 = vadd.f32 %v321, %v612
        %v707 = vadd.f32 %v322, %v617
        %v708 = vadd.f32 %v323, %v620
        %v709 = vadd.f32 %v324, %v625
        %v710 = vadd.f32 %v325, %v628
        %v711 = vadd.f32 %v326, %v633
        %v712 = vadd.f32 %v327, %v636
        %v713 = vadd.f32 %v328, %v641
        %v714 = vadd.f32 %v329, %v644
        %v715 = vadd.f32 %v330, %v649
        %v716 = vadd.f32 %v331, %v652
        %v717 = vadd.f32 %v332, %v657
        %v718 = vadd.f32 %v333, %v660
        %v719 = vadd.f32 %v334, %v665
        %v720 = vadd.f32 %v335, %v668
        %v721 = vadd.f32 %v336, %v673
        %v722 = vadd.f32 %v337, %v676
        %v723 = vadd.f32 %v338, %v681
        %v724 = vadd.f32 %v339, %v684
        %v725 = vadd.f32 %v340, %v689
        %v726 = vadd.f32 %v341, %v692
        %727 = vst [vmem:[#allocation2] sm:$0xff] %v695
        %728 = vst [vmem:[#allocation2 + $0x8] sm:$0xff] %v696
        %729 = vst [vmem:[#allocation2 + $0x10] sm:$0xff] %v697
        %730 = vst [vmem:[#allocation2 + $0x18] sm:$0xff] %v698
        %731 = vst [vmem:[#allocation2 + $0x20] sm:$0xff] %v699
        %732 = vst [vmem:[#allocation2 + $0x28] sm:$0xff] %v700
        %733 = vst [vmem:[#allocation2 + $0x30] sm:$0xff] %v701
        %734 = vst [vmem:[#allocation2 + $0x38] sm:$0xff] %v702
        %735 = vst [vmem:[#allocation2 + $0x40] sm:$0xff] %v703
        %736 = vst [vmem:[#allocation2 + $0x48] sm:$0xff] %v704
        %737 = vst [vmem:[#allocation2 + $0x50] sm:$0xff] %v705
        %738 = vst [vmem:[#allocation2 + $0x58] sm:$0xff] %v706
        %739 = vst [vmem:[#allocation2 + $0x60] sm:$0xff] %v707
        %740 = vst [vmem:[#allocation2 + $0x68] sm:$0xff] %v708
        %741 = vst [vmem:[#allocation2 + $0x70] sm:$0xff] %v709
        %742 = vst [vmem:[#allocation2 + $0x78] sm:$0xff] %v710
        %743 = vst [vmem:[#allocation2 + $0x80] sm:$0xff] %v711
        %744 = vst [vmem:[#allocation2 + $0x88] sm:$0xff] %v712
        %745 = vst [vmem:[#allocation2 + $0x90] sm:$0xff] %v713
        %746 = vst [vmem:[#allocation2 + $0x98] sm:$0xff] %v714
        %747 = vst [vmem:[#allocation2 + $0xa0] sm:$0xff] %v715
        %748 = vst [vmem:[#allocation2 + $0xa8] sm:$0xff] %v716
        %749 = vst [vmem:[#allocation2 + $0xb0] sm:$0xff] %v717
        %750 = vst [vmem:[#allocation2 + $0xb8] sm:$0xff] %v718
        %751 = vst [vmem:[#allocation2 + $0xc0] sm:$0xff] %v719
        %752 = vst [vmem:[#allocation2 + $0xc8] sm:$0xff] %v720
        %753 = vst [vmem:[#allocation2 + $0xd0] sm:$0xff] %v721
        %754 = vst [vmem:[#allocation2 + $0xd8] sm:$0xff] %v722
        %755 = vst [vmem:[#allocation2 + $0xe0] sm:$0xff] %v723
        %756 = vst [vmem:[#allocation2 + $0xe8] sm:$0xff] %v724
        %757 = vst [vmem:[#allocation2 + $0xf0] sm:$0xff] %v725
        %758 = vst [vmem:[#allocation2 + $0xf8] sm:$0xff] %v726
        // Predicated region
        $region41: #{tpu_custom_call.1} parent=27 // pred_check
          %p759 = pneg %p274
        $region42: #{tpu_custom_call.1} parent=27 // pred_check_branch
          %761 = sbr.rel (%p759) target = $region44
        $region43: #{tpu_custom_call.1} parent=27 // pred_region
          %v762 = vld [vmem:[#allocation2] sm:$0xff]
          %v763 = vld [vmem:[#allocation2 + $0x8] sm:$0xff]
          %v764 = vld [vmem:[#allocation2 + $0x10] sm:$0xff]
          %v765 = vld [vmem:[#allocation2 + $0x18] sm:$0xff]
          %v766 = vld [vmem:[#allocation2 + $0x20] sm:$0xff]
          %v767 = vld [vmem:[#allocation2 + $0x28] sm:$0xff]
          %v768 = vld [vmem:[#allocation2 + $0x30] sm:$0xff]
          %v769 = vld [vmem:[#allocation2 + $0x38] sm:$0xff]
          %v770 = vld [vmem:[#allocation2 + $0x40] sm:$0xff]
          %v771 = vld [vmem:[#allocation2 + $0x48] sm:$0xff]
          %v772 = vld [vmem:[#allocation2 + $0x50] sm:$0xff]
          %v773 = vld [vmem:[#allocation2 + $0x58] sm:$0xff]
          %v774 = vld [vmem:[#allocation2 + $0x60] sm:$0xff]
          %v775 = vld [vmem:[#allocation2 + $0x68] sm:$0xff]
          %v776 = vld [vmem:[#allocation2 + $0x70] sm:$0xff]
          %v777 = vld [vmem:[#allocation2 + $0x78] sm:$0xff]
          %v778 = vld [vmem:[#allocation2 + $0x80] sm:$0xff]
          %v779 = vld [vmem:[#allocation2 + $0x88] sm:$0xff]
          %v780 = vld [vmem:[#allocation2 + $0x90] sm:$0xff]
          %v781 = vld [vmem:[#allocation2 + $0x98] sm:$0xff]
          %v782 = vld [vmem:[#allocation2 + $0xa0] sm:$0xff]
          %v783 = vld [vmem:[#allocation2 + $0xa8] sm:$0xff]
          %v784 = vld [vmem:[#allocation2 + $0xb0] sm:$0xff]
          %v785 = vld [vmem:[#allocation2 + $0xb8] sm:$0xff]
          %v786 = vld [vmem:[#allocation2 + $0xc0] sm:$0xff]
          %v787 = vld [vmem:[#allocation2 + $0xc8] sm:$0xff]
          %v788 = vld [vmem:[#allocation2 + $0xd0] sm:$0xff]
          %v789 = vld [vmem:[#allocation2 + $0xd8] sm:$0xff]
          %v790 = vld [vmem:[#allocation2 + $0xe0] sm:$0xff]
          %v791 = vld [vmem:[#allocation2 + $0xe8] sm:$0xff]
          %v792 = vld [vmem:[#allocation2 + $0xf0] sm:$0xff]
          %v793 = vld [vmem:[#allocation2 + $0xf8] sm:$0xff]
          %v794 = vpack.c.bf16 %v763, %v762
          %v795 = vpack.c.bf16 %v765, %v764
          %v796 = vpack.c.bf16 %v767, %v766
          %v797 = vpack.c.bf16 %v769, %v768
          %v798 = vpack.c.bf16 %v771, %v770
          %v799 = vpack.c.bf16 %v773, %v772
          %v800 = vpack.c.bf16 %v775, %v774
          %v801 = vpack.c.bf16 %v777, %v776
          %v802 = vpack.c.bf16 %v779, %v778
          %v803 = vpack.c.bf16 %v781, %v780
          %v804 = vpack.c.bf16 %v783, %v782
          %v805 = vpack.c.bf16 %v785, %v784
          %v806 = vpack.c.bf16 %v787, %v786
          %v807 = vpack.c.bf16 %v789, %v788
          %v808 = vpack.c.bf16 %v791, %v790
          %v809 = vpack.c.bf16 %v793, %v792
          %v826 = vunpack.c.l.b16 %v794
          %v827 = vunpack.c.h.b16 %v794
          %v828 = vunpack.c.l.b16 %v795
          %v829 = vunpack.c.h.b16 %v795
          %v830 = vunpack.c.l.b16 %v796
          %v831 = vunpack.c.h.b16 %v796
          %v832 = vunpack.c.l.b16 %v797
          %v833 = vunpack.c.h.b16 %v797
          %v834 = vunpack.c.l.b16 %v798
          %v835 = vunpack.c.h.b16 %v798
          %v836 = vunpack.c.l.b16 %v799
          %v837 = vunpack.c.h.b16 %v799
          %v838 = vunpack.c.l.b16 %v800
          %v839 = vunpack.c.h.b16 %v800
          %v840 = vunpack.c.l.b16 %v801
          %v841 = vunpack.c.h.b16 %v801
          %v842 = vunpack.c.l.b16 %v802
          %v843 = vunpack.c.h.b16 %v802
          %v844 = vunpack.c.l.b16 %v803
          %v845 = vunpack.c.h.b16 %v803
          %v846 = vunpack.c.l.b16 %v804
          %v847 = vunpack.c.h.b16 %v804
          %v848 = vunpack.c.l.b16 %v805
          %v849 = vunpack.c.h.b16 %v805
          %v850 = vunpack.c.l.b16 %v806
          %v851 = vunpack.c.h.b16 %v806
          %v852 = vunpack.c.l.b16 %v807
          %v853 = vunpack.c.h.b16 %v807
          %v854 = vunpack.c.l.b16 %v808
          %v855 = vunpack.c.h.b16 %v808
          %v856 = vunpack.c.l.b16 %v809
          %v857 = vunpack.c.h.b16 %v809
          %v858 = vpack.c.b16 %v826, %v826
          %v859 = vpack.c.b16 %v827, %v827
          %v860 = vpack.c.b16 %v828, %v828
          %v861 = vpack.c.b16 %v829, %v829
          %v862 = vpack.c.b16 %v830, %v830
          %v863 = vpack.c.b16 %v831, %v831
          %v864 = vpack.c.b16 %v832, %v832
          %v865 = vpack.c.b16 %v833, %v833
          %v866 = vpack.c.b16 %v834, %v834
          %v867 = vpack.c.b16 %v835, %v835
          %v868 = vpack.c.b16 %v836, %v836
          %v869 = vpack.c.b16 %v837, %v837
          %v870 = vpack.c.b16 %v838, %v838
          %v871 = vpack.c.b16 %v839, %v839
          %v872 = vpack.c.b16 %v840, %v840
          %v873 = vpack.c.b16 %v841, %v841
          %v874 = vpack.c.b16 %v842, %v842
          %v875 = vpack.c.b16 %v843, %v843
          %v876 = vpack.c.b16 %v844, %v844
          %v877 = vpack.c.b16 %v845, %v845
          %v878 = vpack.c.b16 %v846, %v846
          %v879 = vpack.c.b16 %v847, %v847
          %v880 = vpack.c.b16 %v848, %v848
          %v881 = vpack.c.b16 %v849, %v849
          %v882 = vpack.c.b16 %v850, %v850
          %v883 = vpack.c.b16 %v851, %v851
          %v884 = vpack.c.b16 %v852, %v852
          %v885 = vpack.c.b16 %v853, %v853
          %v886 = vpack.c.b16 %v854, %v854
          %v887 = vpack.c.b16 %v855, %v855
          %v888 = vpack.c.b16 %v856, %v856
          %v889 = vpack.c.b16 %v857, %v857
          %922 = vst [vmem:[%s257] sm:$0xf] %v858
          %923 = vst [vmem:[%s257 + $0x4] sm:$0xf] %v859
          %924 = vst [vmem:[%s257 + $0x8] sm:$0xf] %v860
          %925 = vst [vmem:[%s257 + $0xc] sm:$0xf] %v861
          %926 = vst [vmem:[%s257 + $0x10] sm:$0xf] %v862
          %927 = vst [vmem:[%s257 + $0x14] sm:$0xf] %v863
          %928 = vst [vmem:[%s257 + $0x18] sm:$0xf] %v864
          %929 = vst [vmem:[%s257 + $0x1c] sm:$0xf] %v865
          %930 = vst [vmem:[%s257 + $0x20] sm:$0xf] %v866
          %931 = vst [vmem:[%s257 + $0x24] sm:$0xf] %v867
          %932 = vst [vmem:[%s257 + $0x28] sm:$0xf] %v868
          %933 = vst [vmem:[%s257 + $0x2c] sm:$0xf] %v869
          %934 = vst [vmem:[%s257 + $0x30] sm:$0xf] %v870
          %935 = vst [vmem:[%s257 + $0x34] sm:$0xf] %v871
          %936 = vst [vmem:[%s257 + $0x38] sm:$0xf] %v872
          %937 = vst [vmem:[%s257 + $0x3c] sm:$0xf] %v873
          %938 = vst [vmem:[%s257 + $0x40] sm:$0xf] %v874
          %939 = vst [vmem:[%s257 + $0x44] sm:$0xf] %v875
          %940 = vst [vmem:[%s257 + $0x48] sm:$0xf] %v876
          %941 = vst [vmem:[%s257 + $0x4c] sm:$0xf] %v877
          %942 = vst [vmem:[%s257 + $0x50] sm:$0xf] %v878
          %943 = vst [vmem:[%s257 + $0x54] sm:$0xf] %v879
          %944 = vst [vmem:[%s257 + $0x58] sm:$0xf] %v880
          %945 = vst [vmem:[%s257 + $0x5c] sm:$0xf] %v881
          %946 = vst [vmem:[%s257 + $0x60] sm:$0xf] %v882
          %947 = vst [vmem:[%s257 + $0x64] sm:$0xf] %v883
          %948 = vst [vmem:[%s257 + $0x68] sm:$0xf] %v884
          %949 = vst [vmem:[%s257 + $0x6c] sm:$0xf] %v885
          %950 = vst [vmem:[%s257 + $0x70] sm:$0xf] %v886
          %951 = vst [vmem:[%s257 + $0x74] sm:$0xf] %v887
          %952 = vst [vmem:[%s257 + $0x78] sm:$0xf] %v888
          %953 = vst [vmem:[%s257 + $0x7c] sm:$0xf] %v889
          %v954 = vadd.f32 %v762, %v763
          %v955 = vadd.f32 %v954, %v764
          %v956 = vadd.f32 %v955, %v765
          %v957 = vadd.f32 %v956, %v766
          %v958 = vadd.f32 %v957, %v767
          %v959 = vadd.f32 %v958, %v768
          %v960 = vadd.f32 %v959, %v769
          %v961 = vadd.f32 %v960, %v770
          %v962 = vadd.f32 %v961, %v771
          %v963 = vadd.f32 %v962, %v772
          %v964 = vadd.f32 %v963, %v773
          %v965 = vadd.f32 %v964, %v774
          %v966 = vadd.f32 %v965, %v775
          %v967 = vadd.f32 %v966, %v776
          %v968 = vadd.f32 %v967, %v777
          %v969 = vadd.f32 %v968, %v778
          %v970 = vadd.f32 %v969, %v779
          %v971 = vadd.f32 %v970, %v780
          %v972 = vadd.f32 %v971, %v781
          %v973 = vadd.f32 %v972, %v782
          %v974 = vadd.f32 %v973, %v783
          %v975 = vadd.f32 %v974, %v784
          %v976 = vadd.f32 %v975, %v785
          %v977 = vadd.f32 %v976, %v786
          %v978 = vadd.f32 %v977, %v787
          %v979 = vadd.f32 %v978, %v788
          %v980 = vadd.f32 %v979, %v789
          %v981 = vadd.f32 %v980, %v790
          %v982 = vadd.f32 %v981, %v791
          %v983 = vadd.f32 %v982, %v792
          %v984 = vadd.f32 %v983, %v793
          %v985 = vrot.slane %v984, 4
          %v986 = vadd.f32 %v984, %v985
          %v987 = vrot.slane %v986, 2
          %v988 = vadd.f32 %v986, %v987
          %v989 = vrot.slane %v988, 1
          %v990 = vadd.f32 %v988, %v989
          %v991 = vmul.f32 %v762, %v762
          %v992 = vmul.f32 %v763, %v763
          %v993 = vmul.f32 %v764, %v764
          %v994 = vmul.f32 %v765, %v765
          %v995 = vmul.f32 %v766, %v766
          %v996 = vmul.f32 %v767, %v767
          %v997 = vmul.f32 %v768, %v768
          %v998 = vmul.f32 %v769, %v769
          %v999 = vmul.f32 %v770, %v770
          %v1000 = vmul.f32 %v771, %v771
          %v1001 = vmul.f32 %v772, %v772
          %v1002 = vmul.f32 %v773, %v773
          %v1003 = vmul.f32 %v774, %v774
          %v1004 = vmul.f32 %v775, %v775
          %v1005 = vmul.f32 %v776, %v776
          %v1006 = vmul.f32 %v777, %v777
          %v1007 = vmul.f32 %v778, %v778
          %v1008 = vmul.f32 %v779, %v779
          %v1009 = vmul.f32 %v780, %v780
          %v1010 = vmul.f32 %v781, %v781
          %v1011 = vmul.f32 %v782, %v782
          %v1012 = vmul.f32 %v783, %v783
          %v1013 = vmul.f32 %v784, %v784
          %v1014 = vmul.f32 %v785, %v785
          %v1015 = vmul.f32 %v786, %v786
          %v1016 = vmul.f32 %v787, %v787
          %v1017 = vmul.f32 %v788, %v788
          %v1018 = vmul.f32 %v789, %v789
          %v1019 = vmul.f32 %v790, %v790
          %v1020 = vmul.f32 %v791, %v791
          %v1021 = vmul.f32 %v792, %v792
          %v1022 = vmul.f32 %v793, %v793
          %v1023 = vadd.f32 %v991, %v992
          %v1024 = vadd.f32 %v1023, %v993
          %v1025 = vadd.f32 %v1024, %v994
          %v1026 = vadd.f32 %v1025, %v995
          %v1027 = vadd.f32 %v1026, %v996
          %v1028 = vadd.f32 %v1027, %v997
          %v1029 = vadd.f32 %v1028, %v998
          %v1030 = vadd.f32 %v1029, %v999
          %v1031 = vadd.f32 %v1030, %v1000
          %v1032 = vadd.f32 %v1031, %v1001
          %v1033 = vadd.f32 %v1032, %v1002
          %v1034 = vadd.f32 %v1033, %v1003
          %v1035 = vadd.f32 %v1034, %v1004
          %v1036 = vadd.f32 %v1035, %v1005
          %v1037 = vadd.f32 %v1036, %v1006
          %v1038 = vadd.f32 %v1037, %v1007
          %v1039 = vadd.f32 %v1038, %v1008
          %v1040 = vadd.f32 %v1039, %v1009
          %v1041 = vadd.f32 %v1040, %v1010
          %v1042 = vadd.f32 %v1041, %v1011
          %v1043 = vadd.f32 %v1042, %v1012
          %v1044 = vadd.f32 %v1043, %v1013
          %v1045 = vadd.f32 %v1044, %v1014
          %v1046 = vadd.f32 %v1045, %v1015
          %v1047 = vadd.f32 %v1046, %v1016
          %v1048 = vadd.f32 %v1047, %v1017
          %v1049 = vadd.f32 %v1048, %v1018
          %v1050 = vadd.f32 %v1049, %v1019
          %v1051 = vadd.f32 %v1050, %v1020
          %v1052 = vadd.f32 %v1051, %v1021
          %v1053 = vadd.f32 %v1052, %v1022
          %v1054 = vrot.slane %v1053, 4
          %v1055 = vadd.f32 %v1053, %v1054
          %v1056 = vrot.slane %v1055, 2
          %v1057 = vadd.f32 %v1055, %v1056
          %v1058 = vrot.slane %v1057, 1
          %v1059 = vadd.f32 %v1057, %v1058
          %1060 = vst [vmem:[%s263] sm:$0x1] %v990
          %1061 = vst [vmem:[%s269] sm:$0x1] %v1059
        $region44: #{tpu_custom_call.1} parent=27 // pred_fallthru
          _
        %s1062 = sand.u32 %s100, 1
        %s1063 = scalar_lea.sflag [#allocation5], %s1062
        %s1064 = sand.u32 %s100, 1
        %s1065 = smul.addr %s1064, 128
        %s1066 = scalar_lea.vmem [#allocation8], %s1065
        %s1067 = sand.u32 %s26, 1
        %s1068 = scalar_lea.sflag [#allocation10], %s1067
        %s1069 = sand.u32 %s126, 1
        %s1070 = scalar_lea.vmem [#allocation9], %s1069
        %s1071 = sand.u32 %s26, 1
        %s1072 = scalar_lea.sflag [#allocation10], %s1071
        %s1073 = sand.u32 %s152, 1
        %s1074 = scalar_lea.vmem [#allocation11], %s1073
        // Predicated region
        $region45: #{tpu_custom_call.1} parent=27 // pred_check
          %p1075 = pneg %p110
        $region46: #{tpu_custom_call.1} parent=27 // pred_check_branch
          %1077 = sbr.rel (%p1075) target = $region48
        $region47: #{tpu_custom_call.1} parent=27 // pred_region
          %s1078 = smul.u32 32, %s30
          %s1080 = ssub.s32 2048, 2048
          %1081 = vsyncadd %s1063, %s1080
          %s1082 = smul.addr %s1078, 64
          %s1083 = scalar_lea.hbm %s2, %s1082
          %s1084 = sshll.u32 %s1066, 4
          %s1085 = int_to_ptr.vmem [resolvable:$true] %s1084
          %1090 = dma.vmem_to_hbm [thread:$0]  %s1085, 2048, %s1083, %s1063, 64, 64, 4
        $region48: #{tpu_custom_call.1} parent=27 // pred_fallthru
          _
        // Predicated region
        $region49: #{tpu_custom_call.1} parent=27 // pred_check
          %p1091 = pneg %p136
        $region50: #{tpu_custom_call.1} parent=27 // pred_check_branch
          %1093 = sbr.rel (%p1091) target = $region52
        $region51: #{tpu_custom_call.1} parent=27 // pred_region
          %s1095 = ssub.s32 16, 16
          %1096 = vsyncadd %s1068, %s1095
          %s1097 = smul.addr %s30, 16
          %s1098 = scalar_lea.hbm %s3, %s1097
          %s1100 = sshll.u32 %s1070, 4
          %s1101 = int_to_ptr.vmem [resolvable:$true] %s1100
          %1103 = dma.vmem_to_hbm [thread:$0]  %s1101, 16, %s1098, %s1068
        $region52: #{tpu_custom_call.1} parent=27 // pred_fallthru
          _
        // Predicated region
        $region53: #{tpu_custom_call.1} parent=27 // pred_check
          %p1104 = pneg %p162
        $region54: #{tpu_custom_call.1} parent=27 // pred_check_branch
          %1106 = sbr.rel (%p1104) target = $region56
        $region55: #{tpu_custom_call.1} parent=27 // pred_region
          %s1108 = ssub.s32 16, 16
          %1109 = vsyncadd %s1072, %s1108
          %s1110 = smul.addr %s30, 16
          %s1111 = scalar_lea.hbm %s4, %s1110
          %s1113 = sshll.u32 %s1074, 4
          %s1114 = int_to_ptr.vmem [resolvable:$true] %s1113
          %1116 = dma.vmem_to_hbm [thread:$0]  %s1114, 16, %s1111, %s1072
        $region56: #{tpu_custom_call.1} parent=27 // pred_fallthru
          _
      $region28: #{tpu_custom_call.1} parent=5 // pred_fallthru
        _
      %p1117 = scmp.le.s32.totalorder 2, %s21
      // Predicated region
      $region57: #{tpu_custom_call.1} parent=5 // pred_check
        %p1118 = pneg %p1117
      $region58: #{tpu_custom_call.1} parent=5 // pred_check_branch
        %1120 = sbr.rel (%p1118) target = $region60
      $region59: #{tpu_custom_call.1} parent=5 // pred_region
        %s1121 = ssub.s32 %s21, 2
        // Predicated region
        $region61: #{tpu_custom_call.1} parent=59 // pred_check
          %p1122 = pneg %p116
        $region62: #{tpu_custom_call.1} parent=59 // pred_check_branch
          %1124 = sbr.rel (%p1122) target = $region64
        $region63: #{tpu_custom_call.1} parent=59 // pred_region
          %s1125 = sand.u32 %s101, 1
          %s1126 = scalar_lea.sflag [#allocation5], %s1125
          %s1127 = sand.u32 %s101, 1
          %s1128 = smul.addr %s1127, 128
          %s1129 = scalar_lea.vmem [#allocation8], %s1128
          %1130 = dma.done %s1126, 2048
        $region64: #{tpu_custom_call.1} parent=59 // pred_fallthru
          _
        // Predicated region
        $region65: #{tpu_custom_call.1} parent=59 // pred_check
          %p1131 = pneg %p142
        $region66: #{tpu_custom_call.1} parent=59 // pred_check_branch
          %1133 = sbr.rel (%p1131) target = $region68
        $region67: #{tpu_custom_call.1} parent=59 // pred_region
          %s1134 = sand.u32 %s27, 1
          %s1135 = scalar_lea.sflag [#allocation10], %s1134
          %s1136 = sand.u32 %s127, 1
          %s1137 = scalar_lea.vmem [#allocation9], %s1136
          %1138 = dma.done %s1135, 16
        $region68: #{tpu_custom_call.1} parent=59 // pred_fallthru
          _
        // Predicated region
        $region69: #{tpu_custom_call.1} parent=59 // pred_check
          %p1139 = pneg %p168
        $region70: #{tpu_custom_call.1} parent=59 // pred_check_branch
          %1141 = sbr.rel (%p1139) target = $region72
        $region71: #{tpu_custom_call.1} parent=59 // pred_region
          %s1142 = sand.u32 %s27, 1
          %s1143 = scalar_lea.sflag [#allocation10], %s1142
          %s1144 = sand.u32 %s153, 1
          %s1145 = scalar_lea.vmem [#allocation11], %s1144
          %1146 = dma.done %s1143, 16
        $region72: #{tpu_custom_call.1} parent=59 // pred_fallthru
          _
      $region60: #{tpu_custom_call.1} parent=5 // pred_fallthru
        _
    $region6: #{tpu_custom_call.1} parent=1 // loop_footer
      %s25 = sadd.s32 1, %s21
    $region7: #{tpu_custom_call.1} parent=1 // loop_footer_branch
      %20 = sbr.rel target = $region3
    $region8: #{tpu_custom_call.1} parent=1 // loop_exit
      _
    %1147 = vsyncpa [#allocation4], 1
    %s1148 = scalar_lea.sflag [#allocation4], 1
    %1149 = vsyncpa %s1148, 1
    %1150 = vsyncpa [#allocation7], 1
    %1151 = vsyncpa [#allocation5], 1
    %s1152 = scalar_lea.sflag [#allocation5], 1
    %1153 = vsyncpa %s1152, 1
    %1154 = vsyncpa [#allocation10], 1
    %s1155 = scalar_lea.sflag [#allocation10], 1
    %1156 = vsyncpa %s1155, 1

// kernel: tpu_custom_call.1
$region0: #{tpu_custom_call.1}
  #allocation0 [shape = 'u32[]', space=smem, size = 0x4, offset = 0x4, fixed_abs, tag = 'smem constant byte address 0x4 - core index']
  #allocation1 [shape = 'u32[144,128]{1,0:T(1,128)}', space=vmem, size = 0x12000, scoped, tag = 'internal scratch']
  #allocation2 [shape = 'f32[256,128]{1,0:T(8,128)}', space=vmem, size = 0x20000, scoped, tag = 'scratch operand']
  %s0 = inlined_call_operand.hbm [shape: bf16[512,128], index: 0, kind: input, shape index: {}]
  %s1 = inlined_call_operand.hbm [shape: bf16[128,128], index: 1, kind: input, shape index: {}]
  %s2 = inlined_call_operand.hbm [shape: bf16[512,128], index: 2, kind: output, shape index: {0}]
  %s3 = inlined_call_operand.hbm [shape: f32[2,1,128], index: 3, kind: output, shape index: {1}]
  %s4 = inlined_call_operand.hbm [shape: f32[2,1,128], index: 4, kind: output, shape index: {2}]
  %5 = xla_tuple %s2, %s3, %s4
  %s6 = sld [smem:[#allocation0]]
  $region73: #{tpu_custom_call.1} parent=0
    _
  %s8 = ssub.s32 1, %s6
  %s9 = scalar_select 0, %s8, %s6
  $region1: #{tpu_custom_call.1} parent=0
    #allocation3 [shape = 'u8[131072]{0}', space=vmem, size = 0x20000, scoped, tag = 'input window, operand 0']
    #allocation4 [shape = 's32[2]{0}', space=sflag, size = 0x8, scoped, tag = 'scoped memory for tpu_custom_call.1']
    #allocation5 [shape = 's32[2]{0}', space=sflag, size = 0x8, scoped, tag = 'scoped memory for tpu_custom_call.1']
    #allocation6 [shape = 'u8[32768]{0}', space=vmem, size = 0x8000, scoped, tag = 'input window, operand 1, single buffered']
    #allocation7 [shape = 's32[1]{0}', space=sflag, size = 0x4, scoped, tag = 'scoped memory for tpu_custom_call.1']
    #allocation8 [shape = 'u8[131072]{0}', space=vmem, size = 0x20000, scoped, tag = 'output window, operand 0']
    #allocation9 [shape = 'u8[1024]{0}', space=vmem, size = 0x400, scoped, tag = 'output window, operand 1']
    #allocation10 [shape = 's32[2]{0}', space=sflag, size = 0x8, scoped, tag = 'scoped memory for tpu_custom_call.1']
    #allocation11 [shape = 'u8[1024]{0}', space=vmem, size = 0x400, scoped, tag = 'output window, operand 2']
    %10 = vsyncpa [#allocation4], 0
    %s11 = scalar_lea.sflag [#allocation4], 1
    %12 = vsyncpa %s11, 0
    %13 = vsyncpa [#allocation7], 0
    %14 = vsyncpa [#allocation5], 0
    %s15 = scalar_lea.sflag [#allocation5], 1
    %16 = vsyncpa %s15, 0
    %17 = vsyncpa [#allocation10], 0
    %s18 = scalar_lea.sflag [#allocation10], 1
    %19 = vsyncpa %s18, 0
    loop: start=0, step=1, limit=4
    $region2: #{tpu_custom_call.1} parent=1 // loop_pre_header
      _
    $region3: #{tpu_custom_call.1} parent=1 // loop_header
      %s21 = sphi 0, %s25
      %p22 = scmp.ge.s32.totalorder %s21, 4
      %s28 = sphi 0, %s40
      %s29 = sphi 0, %s36
      %s30 = sphi 0, %s28
      %s31 = sphi 0, %s29
      %s32 = sphi 0, %s30
      %s33 = sphi 0, %s31
      %s45 = sphi 0, %s47
      %s48 = sphi 0, %s45
      %s49 = sphi 0, %s48
      %s65 = sphi 0, %s49
      %s71 = sphi 0, %s73
      %s74 = sphi 0, %s71
      %s75 = sphi 0, %s74
      %s91 = sphi 0, %s75
      %s97 = sphi 0, %s99
      %s100 = sphi 0, %s97
      %s101 = sphi 0, %s100
      %s117 = sphi 0, %s101
      %s123 = sphi 0, %s125
      %s126 = sphi 0, %s123
      %s127 = sphi 0, %s126
      %s143 = sphi 0, %s127
      %s149 = sphi 0, %s151
      %s152 = sphi 0, %s149
      %s153 = sphi 0, %s152
      %s169 = sphi 0, %s153
    $region4: #{tpu_custom_call.1} parent=1 // loop_header_branch
      %24 = sbr.rel (%p22) target = $region8
    $region5: #{tpu_custom_call.1} parent=1 // loop_body
      %s26 = ssub.s32 %s21, 1
      %s27 = ssub.s32 %s21, 2
      %s34 = sadd.s32 1, %s29
      %p35 = scmp.ge.s32.totalorder %s34, 1
      %s36 = scalar_select %p35, 0, %s34
      %s37 = sadd.s32 1, %s28
      %s38 = scalar_select %p35, %s37, %s28
      %p39 = scmp.ge.s32.totalorder %s38, 2
      %s40 = scalar_select %p39, 0, %s38
      %s41 = ssub.s32 %s28, %s40
      %s42 = ssub.s32 %s29, %s36
      %s43 = sor.u32 %s41, %s42
      %p44 = scmp.eq.s32.totalorder %s43, 0
      %s46 = sadd.s32 %s45, 1
      %s47 = scalar_select %p44, %s45, %s46
      %p50 = pneg %p44
      %p51 = scmp.eq.s32.totalorder %s21, 1
      %p52 = por %p50, %p51
      %p53 = scmp.ne.s32.totalorder %s45, %s48
      %p54 = scmp.eq.s32.totalorder %s21, 0
      %p55 = por %p53, %p54
      %p56 = scmp.ne.s32.totalorder %s45, %s48
      %p57 = scmp.eq.s32.totalorder %s26, 1
      %p58 = por %p56, %p57
      %p59 = scmp.ne.s32.totalorder %s48, %s49
      %p60 = scmp.eq.s32.totalorder %s26, 0
      %p61 = por %p59, %p60
      %p62 = scmp.ne.s32.totalorder %s48, %s49
      %p63 = scmp.eq.s32.totalorder %s27, 1
      %p64 = por %p62, %p63
      %p66 = scmp.ne.s32.totalorder %s49, %s65
      %p67 = scmp.eq.s32.totalorder %s27, 0
      %p68 = por %p66, %p67
      %s69 = ssub.s32 %s29, %s36
      %p70 = scmp.eq.s32.totalorder %s69, 0
      %s72 = sadd.s32 %s71, 1
      %s73 = scalar_select %p70, %s71, %s72
      %p76 = pneg %p70
      %p77 = scmp.eq.s32.totalorder %s21, 1
      %p78 = por %p76, %p77
      %p79 = scmp.ne.s32.totalorder %s71, %s74
      %p80 = scmp.eq.s32.totalorder %s21, 0
      %p81 = por %p79, %p80
      %p82 = scmp.ne.s32.totalorder %s71, %s74
      %p83 = scmp.eq.s32.totalorder %s26, 1
      %p84 = por %p82, %p83
      %p85 = scmp.ne.s32.totalorder %s74, %s75
      %p86 = scmp.eq.s32.totalorder %s26, 0
      %p87 = por %p85, %p86
      %p88 = scmp.ne.s32.totalorder %s74, %s75
      %p89 = scmp.eq.s32.totalorder %s27, 1
      %p90 = por %p88, %p89
      %p92 = scmp.ne.s32.totalorder %s75, %s91
      %p93 = scmp.eq.s32.totalorder %s27, 0
      %p94 = por %p92, %p93
      %s95 = ssub.s32 %s28, %s40
      %p96 = scmp.eq.s32.totalorder %s95, 0
      %s98 = sadd.s32 %s97, 1
      %s99 = scalar_select %p96, %s97, %s98
      %p102 = pneg %p96
      %p103 = scmp.eq.s32.totalorder %s21, 1
      %p104 = por %p102, %p103
      %p105 = scmp.ne.s32.totalorder %s97, %s100
      %p106 = scmp.eq.s32.totalorder %s21, 0
      %p107 = por %p105, %p106
      %p108 = scmp.ne.s32.totalorder %s97, %s100
      %p109 = scmp.eq.s32.totalorder %s26, 1
      %p110 = por %p108, %p109
      %p111 = scmp.ne.s32.totalorder %s100, %s101
      %p112 = scmp.eq.s32.totalorder %s26, 0
      %p113 = por %p111, %p112
      %p114 = scmp.ne.s32.totalorder %s100, %s101
      %p115 = scmp.eq.s32.totalorder %s27, 1
      %p116 = por %p114, %p115
      %p118 = scmp.ne.s32.totalorder %s101, %s117
      %p119 = scmp.eq.s32.totalorder %s27, 0
      %p120 = por %p118, %p119
      %s121 = ssub.s32 %s28, %s40
      %p122 = scmp.eq.s32.totalorder %s121, 0
      %s124 = sadd.s32 %s123, 1
      %s125 = scalar_select %p122, %s123, %s124
      %p128 = pneg %p122
      %p129 = scmp.eq.s32.totalorder %s21, 1
      %p130 = por %p128, %p129
      %p131 = scmp.ne.s32.totalorder %s123, %s126
      %p132 = scmp.eq.s32.totalorder %s21, 0
      %p133 = por %p131, %p132
      %p134 = scmp.ne.s32.totalorder %s123, %s126
      %p135 = scmp.eq.s32.totalorder %s26, 1
      %p136 = por %p134, %p135
      %p137 = scmp.ne.s32.totalorder %s126, %s127
      %p138 = scmp.eq.s32.totalorder %s26, 0
      %p139 = por %p137, %p138
      %p140 = scmp.ne.s32.totalorder %s126, %s127
      %p141 = scmp.eq.s32.totalorder %s27, 1
      %p142 = por %p140, %p141
      %p144 = scmp.ne.s32.totalorder %s127, %s143
      %p145 = scmp.eq.s32.totalorder %s27, 0
      %p146 = por %p144, %p145
      %s147 = ssub.s32 %s28, %s40
      %p148 = scmp.eq.s32.totalorder %s147, 0
      %s150 = sadd.s32 %s149, 1
      %s151 = scalar_select %p148, %s149, %s150
      %p154 = pneg %p148
      %p155 = scmp.eq.s32.totalorder %s21, 1
      %p156 = por %p154, %p155
      %p157 = scmp.ne.s32.totalorder %s149, %s152
      %p158 = scmp.eq.s32.totalorder %s21, 0
      %p159 = por %p157, %p158
      %p160 = scmp.ne.s32.totalorder %s149, %s152
      %p161 = scmp.eq.s32.totalorder %s26, 1
      %p162 = por %p160, %p161
      %p163 = scmp.ne.s32.totalorder %s152, %s153
      %p164 = scmp.eq.s32.totalorder %s26, 0
      %p165 = por %p163, %p164
      %p166 = scmp.ne.s32.totalorder %s152, %s153
      %p167 = scmp.eq.s32.totalorder %s27, 1
      %p168 = por %p166, %p167
      %p170 = scmp.ne.s32.totalorder %s153, %s169
      %p171 = scmp.eq.s32.totalorder %s27, 0
      %p172 = por %p170, %p171
      %p173 = scmp.le.s32.totalorder 1, %s21
      %p174 = scmp.lt.s32.totalorder %s21, 3
      %p175 = pnand %p173, %p174
      %p176 = pneg %p175
      // Predicated region
      $region9: #{tpu_custom_call.1} parent=5 // pred_check
        _
      $region10: #{tpu_custom_call.1} parent=5 // pred_check_branch
        %178 = sbr.rel (%p175) target = $region12
      $region11: #{tpu_custom_call.1} parent=5 // pred_region
        %s179 = ssub.s32 %s21, 1
        // Predicated region
        $region13: #{tpu_custom_call.1} parent=11 // pred_check
          %p180 = pneg %p87
        $region14: #{tpu_custom_call.1} parent=11 // pred_check_branch
          %182 = sbr.rel (%p180) target = $region16
        $region15: #{tpu_custom_call.1} parent=11 // pred_region
          %s183 = smul.u32 16, %s31
          %s185 = ssub.s32 1024, 1024
          %186 = vsyncadd [#allocation7], %s185
          %s187 = smul.addr %s183, 64
          %s188 = scalar_lea.hbm %s1, %s187
          %s189 = sshll.u32 [#allocation6], 4
          %s190 = int_to_ptr.vmem [resolvable:$true] %s189
          %195 = dma.hbm_to_vmem [thread:$0]  %s188, 1024, %s190, [#allocation7], 64, 64, 4
        $region16: #{tpu_custom_call.1} parent=11 // pred_fallthru
          _
      $region12: #{tpu_custom_call.1} parent=5 // pred_fallthru
        _
      %p196 = scmp.lt.s32.totalorder %s21, 2
      // Predicated region
      $region17: #{tpu_custom_call.1} parent=5 // pred_check
        %p197 = pneg %p196
      $region18: #{tpu_custom_call.1} parent=5 // pred_check_branch
        %199 = sbr.rel (%p197) target = $region20
      $region19: #{tpu_custom_call.1} parent=5 // pred_region
        // Predicated region
        $region21: #{tpu_custom_call.1} parent=19 // pred_check
          %p200 = pneg %p55
        $region22: #{tpu_custom_call.1} parent=19 // pred_check_branch
          %202 = sbr.rel (%p200) target = $region24
        $region23: #{tpu_custom_call.1} parent=19 // pred_region
          %s203 = sand.u32 %s45, 1
          %s204 = scalar_lea.sflag [#allocation4], %s203
          %s205 = sand.u32 %s45, 1
          %s206 = smul.addr %s205, 128
          %s207 = scalar_lea.vmem [#allocation3], %s206
          %s208 = smul.u32 32, %s28
          %s210 = ssub.s32 2048, 2048
          %211 = vsyncadd %s204, %s210
          %s212 = sadd.s32 %s29, %s208
          %s213 = smul.addr %s212, 64
          %s214 = scalar_lea.hbm %s0, %s213
          %s215 = sshll.u32 %s207, 4
          %s216 = int_to_ptr.vmem [resolvable:$true] %s215
          %221 = dma.hbm_to_vmem [thread:$0]  %s214, 2048, %s216, %s204, 64, 64, 4
        $region24: #{tpu_custom_call.1} parent=19 // pred_fallthru
          _
      $region20: #{tpu_custom_call.1} parent=5 // pred_fallthru
        _
      %p222 = scmp.le.s32.totalorder 1, %s21
      %p223 = scmp.lt.s32.totalorder %s21, 3
      %p224 = pnand %p222, %p223
      %p225 = pneg %p224
      // Predicated region
      $region25: #{tpu_custom_call.1} parent=5 // pred_check
        _
      $region26: #{tpu_custom_call.1} parent=5 // pred_check_branch
        %227 = sbr.rel (%p224) target = $region28
      $region27: #{tpu_custom_call.1} parent=5 // pred_region
        %s228 = ssub.s32 %s21, 1
        %s229 = sand.u32 %s48, 1
        %s230 = scalar_lea.sflag [#allocation4], %s229
        %s231 = sand.u32 %s48, 1
        %s232 = smul.addr %s231, 128
        %s233 = scalar_lea.vmem [#allocation3], %s232
        // Predicated region
        $region29: #{tpu_custom_call.1} parent=27 // pred_check
          %p234 = pneg %p61
        $region30: #{tpu_custom_call.1} parent=27 // pred_check_branch
          %236 = sbr.rel (%p234) target = $region32
        $region31: #{tpu_custom_call.1} parent=27 // pred_region
          %237 = dma.done %s230, 2048
        $region32: #{tpu_custom_call.1} parent=27 // pred_fallthru
          _
        // Predicated region
        $region33: #{tpu_custom_call.1} parent=27 // pred_check
          %p238 = pneg %p87
        $region34: #{tpu_custom_call.1} parent=27 // pred_check_branch
          %240 = sbr.rel (%p238) target = $region36
        $region35: #{tpu_custom_call.1} parent=27 // pred_region
          %241 = dma.done [#allocation7], 1024
        $region36: #{tpu_custom_call.1} parent=27 // pred_fallthru
          _
        %s242 = sand.u32 %s48, 1
        %s243 = scalar_lea.sflag [#allocation4], %s242
        %s244 = sand.u32 %s48, 1
        %s245 = smul.addr %s244, 128
        %s246 = scalar_lea.vmem [#allocation3], %s245
        %p247 = pneg %p61
        %p248 = pneg %p58
        %p249 = pneg %p87
        %p250 = pneg %p84
        %p251 = pneg %p113
        %p252 = pneg %p110
        %s253 = sand.u32 %s100, 1
        %s254 = scalar_lea.sflag [#allocation5], %s253
        %s255 = sand.u32 %s100, 1
        %s256 = smul.addr %s255, 128
        %s257 = scalar_lea.vmem [#allocation8], %s256
        %p258 = pneg %p139
        %p259 = pneg %p136
        %s260 = sand.u32 %s26, 1
        %s261 = scalar_lea.sflag [#allocation10], %s260
        %s262 = sand.u32 %s126, 1
        %s263 = scalar_lea.vmem [#allocation9], %s262
        %p264 = pneg %p165
        %p265 = pneg %p162
        %s266 = sand.u32 %s26, 1
        %s267 = scalar_lea.sflag [#allocation10], %s266
        %s268 = sand.u32 %s152, 1
        %s269 = scalar_lea.vmem [#allocation11], %s268
        %s270 = smul.u32 32, %s30
        %s271 = smul.u32 16, %s31
        %s272 = smul.u32 32, %s30
        %p274 = scmp.eq.s32.totalorder %s31, 0
        // Predicated region
        $region37: #{tpu_custom_call.1} parent=27 // pred_check
          %p275 = pneg %p274
        $region38: #{tpu_custom_call.1} parent=27 // pred_check_branch
          %277 = sbr.rel (%p275) target = $region40
        $region39: #{tpu_custom_call.1} parent=27 // pred_region
          %278 = vst [vmem:[#allocation2] sm:$0xff] 0.0
          %279 = vst [vmem:[#allocation2 + $0x8] sm:$0xff] 0.0
          %280 = vst [vmem:[#allocation2 + $0x10] sm:$0xff] 0.0
          %281 = vst [vmem:[#allocation2 + $0x18] sm:$0xff] 0.0
          %282 = vst [vmem:[#allocation2 + $0x20] sm:$0xff] 0.0
          %283 = vst [vmem:[#allocation2 + $0x28] sm:$0xff] 0.0
          %284 = vst [vmem:[#allocation2 + $0x30] sm:$0xff] 0.0
          %285 = vst [vmem:[#allocation2 + $0x38] sm:$0xff] 0.0
          %286 = vst [vmem:[#allocation2 + $0x40] sm:$0xff] 0.0
          %287 = vst [vmem:[#allocation2 + $0x48] sm:$0xff] 0.0
          %288 = vst [vmem:[#allocation2 + $0x50] sm:$0xff] 0.0
          %289 = vst [vmem:[#allocation2 + $0x58] sm:$0xff] 0.0
          %290 = vst [vmem:[#allocation2 + $0x60] sm:$0xff] 0.0
          %291 = vst [vmem:[#allocation2 + $0x68] sm:$0xff] 0.0
          %292 = vst [vmem:[#allocation2 + $0x70] sm:$0xff] 0.0
          %293 = vst [vmem:[#allocation2 + $0x78] sm:$0xff] 0.0
          %294 = vst [vmem:[#allocation2 + $0x80] sm:$0xff] 0.0
          %295 = vst [vmem:[#allocation2 + $0x88] sm:$0xff] 0.0
          %296 = vst [vmem:[#allocation2 + $0x90] sm:$0xff] 0.0
          %297 = vst [vmem:[#allocation2 + $0x98] sm:$0xff] 0.0
          %298 = vst [vmem:[#allocation2 + $0xa0] sm:$0xff] 0.0
          %299 = vst [vmem:[#allocation2 + $0xa8] sm:$0xff] 0.0
          %300 = vst [vmem:[#allocation2 + $0xb0] sm:$0xff] 0.0
          %301 = vst [vmem:[#allocation2 + $0xb8] sm:$0xff] 0.0
          %302 = vst [vmem:[#allocation2 + $0xc0] sm:$0xff] 0.0
          %303 = vst [vmem:[#allocation2 + $0xc8] sm:$0xff] 0.0
          %304 = vst [vmem:[#allocation2 + $0xd0] sm:$0xff] 0.0
          %305 = vst [vmem:[#allocation2 + $0xd8] sm:$0xff] 0.0
          %306 = vst [vmem:[#allocation2 + $0xe0] sm:$0xff] 0.0
          %307 = vst [vmem:[#allocation2 + $0xe8] sm:$0xff] 0.0
          %308 = vst [vmem:[#allocation2 + $0xf0] sm:$0xff] 0.0
          %309 = vst [vmem:[#allocation2 + $0xf8] sm:$0xff] 0.0
        $region40: #{tpu_custom_call.1} parent=27 // pred_fallthru
          _
        %v310 = vld [vmem:[#allocation2] sm:$0xff]
        %v311 = vld [vmem:[#allocation2 + $0x8] sm:$0xff]
        %v312 = vld [vmem:[#allocation2 + $0x10] sm:$0xff]
        %v313 = vld [vmem:[#allocation2 + $0x18] sm:$0xff]
        %v314 = vld [vmem:[#allocation2 + $0x20] sm:$0xff]
        %v315 = vld [vmem:[#allocation2 + $0x28] sm:$0xff]
        %v316 = vld [vmem:[#allocation2 + $0x30] sm:$0xff]
        %v317 = vld [vmem:[#allocation2 + $0x38] sm:$0xff]
        %v318 = vld [vmem:[#allocation2 + $0x40] sm:$0xff]
        %v319 = vld [vmem:[#allocation2 + $0x48] sm:$0xff]
        %v320 = vld [vmem:[#allocation2 + $0x50] sm:$0xff]
        %v321 = vld [vmem:[#allocation2 + $0x58] sm:$0xff]
        %v322 = vld [vmem:[#allocation2 + $0x60] sm:$0xff]
        %v323 = vld [vmem:[#allocation2 + $0x68] sm:$0xff]
        %v324 = vld [vmem:[#allocation2 + $0x70] sm:$0xff]
        %v325 = vld [vmem:[#allocation2 + $0x78] sm:$0xff]
        %v326 = vld [vmem:[#allocation2 + $0x80] sm:$0xff]
        %v327 = vld [vmem:[#allocation2 + $0x88] sm:$0xff]
        %v328 = vld [vmem:[#allocation2 + $0x90] sm:$0xff]
        %v329 = vld [vmem:[#allocation2 + $0x98] sm:$0xff]
        %v330 = vld [vmem:[#allocation2 + $0xa0] sm:$0xff]
        %v331 = vld [vmem:[#allocation2 + $0xa8] sm:$0xff]
        %v332 = vld [vmem:[#allocation2 + $0xb0] sm:$0xff]
        %v333 = vld [vmem:[#allocation2 + $0xb8] sm:$0xff]
        %v334 = vld [vmem:[#allocation2 + $0xc0] sm:$0xff]
        %v335 = vld [vmem:[#allocation2 + $0xc8] sm:$0xff]
        %v336 = vld [vmem:[#allocation2 + $0xd0] sm:$0xff]
        %v337 = vld [vmem:[#allocation2 + $0xd8] sm:$0xff]
        %v338 = vld [vmem:[#allocation2 + $0xe0] sm:$0xff]
        %v339 = vld [vmem:[#allocation2 + $0xe8] sm:$0xff]
        %v340 = vld [vmem:[#allocation2 + $0xf0] sm:$0xff]
        %v341 = vld [vmem:[#allocation2 + $0xf8] sm:$0xff]
        %v342 = vld [vmem:[%s233] sm:$0xf]
        %v343 = vld [vmem:[%s233 + $0x4] sm:$0xf]
        %v344 = vld [vmem:[%s233 + $0x8] sm:$0xf]
        %v345 = vld [vmem:[%s233 + $0xc] sm:$0xf]
        %v346 = vld [vmem:[%s233 + $0x10] sm:$0xf]
        %v347 = vld [vmem:[%s233 + $0x14] sm:$0xf]
        %v348 = vld [vmem:[%s233 + $0x18] sm:$0xf]
        %v349 = vld [vmem:[%s233 + $0x1c] sm:$0xf]
        %v350 = vld [vmem:[%s233 + $0x20] sm:$0xf]
        %v351 = vld [vmem:[%s233 + $0x24] sm:$0xf]
        %v352 = vld [vmem:[%s233 + $0x28] sm:$0xf]
        %v353 = vld [vmem:[%s233 + $0x2c] sm:$0xf]
        %v354 = vld [vmem:[%s233 + $0x30] sm:$0xf]
        %v355 = vld [vmem:[%s233 + $0x34] sm:$0xf]
        %v356 = vld [vmem:[%s233 + $0x38] sm:$0xf]
        %v357 = vld [vmem:[%s233 + $0x3c] sm:$0xf]
        %v358 = vld [vmem:[%s233 + $0x40] sm:$0xf]
        %v359 = vld [vmem:[%s233 + $0x44] sm:$0xf]
        %v360 = vld [vmem:[%s233 + $0x48] sm:$0xf]
        %v361 = vld [vmem:[%s233 + $0x4c] sm:$0xf]
        %v362 = vld [vmem:[%s233 + $0x50] sm:$0xf]
        %v363 = vld [vmem:[%s233 + $0x54] sm:$0xf]
        %v364 = vld [vmem:[%s233 + $0x58] sm:$0xf]
        %v365 = vld [vmem:[%s233 + $0x5c] sm:$0xf]
        %v366 = vld [vmem:[%s233 + $0x60] sm:$0xf]
        %v367 = vld [vmem:[%s233 + $0x64] sm:$0xf]
        %v368 = vld [vmem:[%s233 + $0x68] sm:$0xf]
        %v369 = vld [vmem:[%s233 + $0x6c] sm:$0xf]
        %v370 = vld [vmem:[%s233 + $0x70] sm:$0xf]
        %v371 = vld [vmem:[%s233 + $0x74] sm:$0xf]
        %v372 = vld [vmem:[%s233 + $0x78] sm:$0xf]
        %v373 = vld [vmem:[%s233 + $0x7c] sm:$0xf]
        %v374 = vld [vmem:[#allocation6] sm:$0xf]
        %v375 = vld [vmem:[#allocation6 + $0x4] sm:$0xf]
        %v376 = vld [vmem:[#allocation6 + $0x8] sm:$0xf]
        %v377 = vld [vmem:[#allocation6 + $0xc] sm:$0xf]
        %v378 = vld [vmem:[#allocation6 + $0x10] sm:$0xf]
        %v379 = vld [vmem:[#allocation6 + $0x14] sm:$0xf]
        %v380 = vld [vmem:[#allocation6 + $0x18] sm:$0xf]
        %v381 = vld [vmem:[#allocation6 + $0x1c] sm:$0xf]
        %v382 = vld [vmem:[#allocation6 + $0x20] sm:$0xf]
        %v383 = vld [vmem:[#allocation6 + $0x24] sm:$0xf]
        %v384 = vld [vmem:[#allocation6 + $0x28] sm:$0xf]
        %v385 = vld [vmem:[#allocation6 + $0x2c] sm:$0xf]
        %v386 = vld [vmem:[#allocation6 + $0x30] sm:$0xf]
        %v387 = vld [vmem:[#allocation6 + $0x34] sm:$0xf]
        %v388 = vld [vmem:[#allocation6 + $0x38] sm:$0xf]
        %v389 = vld [vmem:[#allocation6 + $0x3c] sm:$0xf]
        %v422 = vunpack.c.l.b16 %v342
        %v423 = vunpack.c.l.b16 %v343
        %v424 = vunpack.c.l.b16 %v344
        %v425 = vunpack.c.l.b16 %v345
        %v426 = vunpack.c.l.b16 %v346
        %v427 = vunpack.c.l.b16 %v347
        %v428 = vunpack.c.l.b16 %v348
        %v429 = vunpack.c.l.b16 %v349
        %v430 = vunpack.c.l.b16 %v350
        %v431 = vunpack.c.l.b16 %v351
        %v432 = vunpack.c.l.b16 %v352
        %v433 = vunpack.c.l.b16 %v353
        %v434 = vunpack.c.l.b16 %v354
        %v435 = vunpack.c.l.b16 %v355
        %v436 = vunpack.c.l.b16 %v356
        %v437 = vunpack.c.l.b16 %v357
        %v438 = vunpack.c.l.b16 %v358
        %v439 = vunpack.c.l.b16 %v359
        %v440 = vunpack.c.l.b16 %v360
        %v441 = vunpack.c.l.b16 %v361
        %v442 = vunpack.c.l.b16 %v362
        %v443 = vunpack.c.l.b16 %v363
        %v444 = vunpack.c.l.b16 %v364
        %v445 = vunpack.c.l.b16 %v365
        %v446 = vunpack.c.l.b16 %v366
        %v447 = vunpack.c.l.b16 %v367
        %v448 = vunpack.c.l.b16 %v368
        %v449 = vunpack.c.l.b16 %v369
        %v450 = vunpack.c.l.b16 %v370
        %v451 = vunpack.c.l.b16 %v371
        %v452 = vunpack.c.l.b16 %v372
        %v453 = vunpack.c.l.b16 %v373
        %v454 = vpack.c.b16 %v423, %v422
        %v455 = vpack.c.b16 %v425, %v424
        %v456 = vpack.c.b16 %v427, %v426
        %v457 = vpack.c.b16 %v429, %v428
        %v458 = vpack.c.b16 %v431, %v430
        %v459 = vpack.c.b16 %v433, %v432
        %v460 = vpack.c.b16 %v435, %v434
        %v461 = vpack.c.b16 %v437, %v436
        %v462 = vpack.c.b16 %v439, %v438
        %v463 = vpack.c.b16 %v441, %v440
        %v464 = vpack.c.b16 %v443, %v442
        %v465 = vpack.c.b16 %v445, %v444
        %v466 = vpack.c.b16 %v447, %v446
        %v467 = vpack.c.b16 %v449, %v448
        %v468 = vpack.c.b16 %v451, %v450
        %v469 = vpack.c.b16 %v453, %v452
        %v502 = vunpack.c.l.b16 %v374
        %v503 = vunpack.c.l.b16 %v375
        %v504 = vunpack.c.l.b16 %v376
        %v505 = vunpack.c.l.b16 %v377
        %v506 = vunpack.c.l.b16 %v378
        %v507 = vunpack.c.l.b16 %v379
        %v508 = vunpack.c.l.b16 %v380
        %v509 = vunpack.c.l.b16 %v381
        %v510 = vunpack.c.l.b16 %v382
        %v511 = vunpack.c.l.b16 %v383
        %v512 = vunpack.c.l.b16 %v384
        %v513 = vunpack.c.l.b16 %v385
        %v514 = vunpack.c.l.b16 %v386
        %v515 = vunpack.c.l.b16 %v387
        %v516 = vunpack.c.l.b16 %v388
        %v517 = vunpack.c.l.b16 %v389
        %v518 = vpack.c.b16 %v503, %v502
        %v519 = vpack.c.b16 %v505, %v504
        %v520 = vpack.c.b16 %v507, %v506
        %v521 = vpack.c.b16 %v509, %v508
        %v522 = vpack.c.b16 %v511, %v510
        %v523 = vpack.c.b16 %v513, %v512
        %v524 = vpack.c.b16 %v515, %v514
        %v525 = vpack.c.b16 %v517, %v516
        %534 = vmatprep.subr.bf16.mxu0 0
        %535 = vmatpush1.bf16.msra.mxu0 %v518
        %536 = vmatprep.subr.bf16.mxu0 0
        %537 = vmatpush1.bf16.msra.mxu0 %v519
        %538 = vmatprep.subr.bf16.mxu0 0
        %539 = vmatpush1.bf16.msra.mxu0 %v520
        %540 = vmatprep.subr.bf16.mxu0 0
        %541 = vmatpush1.bf16.msra.mxu0 %v521
        %542 = vmatprep.subr.bf16.mxu0 0
        %543 = vmatpush1.bf16.msra.mxu0 %v522
        %544 = vmatprep.subr.bf16.mxu0 0
        %545 = vmatpush1.bf16.msra.mxu0 %v523
        %546 = vmatprep.subr.bf16.mxu0 0
        %547 = vmatpush1.bf16.msra.mxu0 %v524
        %548 = vmatprep.subr.bf16.mxu0 0
        %549 = vmatpush1.bf16.msra.mxu0 %v525
        %550 = vmatprep.subr.bf16.mxu0 0
        %551 = vmatpush1.bf16.msra.mxu0 0
        %552 = vmatprep.subr.bf16.mxu0 0
        %553 = vmatpush1.bf16.msra.mxu0 0
        %554 = vmatprep.subr.bf16.mxu0 0
        %555 = vmatpush1.bf16.msra.mxu0 0
        %556 = vmatprep.subr.bf16.mxu0 0
        %557 = vmatpush1.bf16.msra.mxu0 0
        %558 = vmatprep.subr.bf16.mxu0 0
        %559 = vmatpush1.bf16.msra.mxu0 0
        %560 = vmatprep.subr.bf16.mxu0 0
        %561 = vmatpush1.bf16.msra.mxu0 0
        %562 = vmatprep.subr.bf16.mxu0 0
        %563 = vmatpush1.bf16.msra.mxu0 0
        %564 = vmatprep.subr.bf16.mxu0 0
        %565 = vmatpush1.bf16.msra.mxu0 0
        %566 = vmatprep.mubr.bf16.mxu0 0
        %567 = vmatmul.mubr.bf16.gmra.mrb[0].mxu0 %v454
        %v568 = vpop.f32.mrb[0].mxu0
        %v569 = vadd.f32 0.0, %v568
        %v570 = vpop.f32.mrb[0].mxu0
        %v571 = vpop.f32.mrb[0].mxu0
        %v572 = vadd.f32 0.0, %v571
        %v573 = vpop.f32.mrb[0].mxu0
        %574 = vmatprep.mubr.bf16.mxu0 0
        %575 = vmatmul.mubr.bf16.gmra.mrb[0].mxu0 %v455
        %v576 = vpop.f32.mrb[0].mxu0
        %v577 = vadd.f32 0.0, %v576
        %v578 = vpop.f32.mrb[0].mxu0
        %v579 = vpop.f32.mrb[0].mxu0
        %v580 = vadd.f32 0.0, %v579
        %v581 = vpop.f32.mrb[0].mxu0
        %582 = vmatprep.mubr.bf16.mxu0 0
        %583 = vmatmul.mubr.bf16.gmra.mrb[0].mxu0 %v456
        %v584 = vpop.f32.mrb[0].mxu0
        %v585 = vadd.f32 0.0, %v584
        %v586 = vpop.f32.mrb[0].mxu0
        %v587 = vpop.f32.mrb[0].mxu0
        %v588 = vadd.f32 0.0, %v587
        %v589 = vpop.f32.mrb[0].mxu0
        %590 = vmatprep.mubr.bf16.mxu0 0
        %591 = vmatmul.mubr.bf16.gmra.mrb[0].mxu0 %v457
        %v592 = vpop.f32.mrb[0].mxu0
        %v593 = vadd.f32 0.0, %v592
        %v594 = vpop.f32.mrb[0].mxu0
        %v595 = vpop.f32.mrb[0].mxu0
        %v596 = vadd.f32 0.0, %v595
        %v597 = vpop.f32.mrb[0].mxu0
        %598 = vmatprep.mubr.bf16.mxu0 0
        %599 = vmatmul.mubr.bf16.gmra.mrb[0].mxu0 %v458
        %v600 = vpop.f32.mrb[0].mxu0
        %v601 = vadd.f32 0.0, %v600
        %v602 = vpop.f32.mrb[0].mxu0
        %v603 = vpop.f32.mrb[0].mxu0
        %v604 = vadd.f32 0.0, %v603
        %v605 = vpop.f32.mrb[0].mxu0
        %606 = vmatprep.mubr.bf16.mxu0 0
        %607 = vmatmul.mubr.bf16.gmra.mrb[0].mxu0 %v459
        %v608 = vpop.f32.mrb[0].mxu0
        %v609 = vadd.f32 0.0, %v608
        %v610 = vpop.f32.mrb[0].mxu0
        %v611 = vpop.f32.mrb[0].mxu0
        %v612 = vadd.f32 0.0, %v611
        %v613 = vpop.f32.mrb[0].mxu0
        %614 = vmatprep.mubr.bf16.mxu0 0
        %615 = vmatmul.mubr.bf16.gmra.mrb[0].mxu0 %v460
        %v616 = vpop.f32.mrb[0].mxu0
        %v617 = vadd.f32 0.0, %v616
        %v618 = vpop.f32.mrb[0].mxu0
        %v619 = vpop.f32.mrb[0].mxu0
        %v620 = vadd.f32 0.0, %v619
        %v621 = vpop.f32.mrb[0].mxu0
        %622 = vmatprep.mubr.bf16.mxu0 0
        %623 = vmatmul.mubr.bf16.gmra.mrb[0].mxu0 %v461
        %v624 = vpop.f32.mrb[0].mxu0
        %v625 = vadd.f32 0.0, %v624
        %v626 = vpop.f32.mrb[0].mxu0
        %v627 = vpop.f32.mrb[0].mxu0
        %v628 = vadd.f32 0.0, %v627
        %v629 = vpop.f32.mrb[0].mxu0
        %630 = vmatprep.mubr.bf16.mxu0 0
        %631 = vmatmul.mubr.bf16.gmra.mrb[0].mxu0 %v462
        %v632 = vpop.f32.mrb[0].mxu0
        %v633 = vadd.f32 0.0, %v632
        %v634 = vpop.f32.mrb[0].mxu0
        %v635 = vpop.f32.mrb[0].mxu0
        %v636 = vadd.f32 0.0, %v635
        %v637 = vpop.f32.mrb[0].mxu0
        %638 = vmatprep.mubr.bf16.mxu0 0
        %639 = vmatmul.mubr.bf16.gmra.mrb[0].mxu0 %v463
        %v640 = vpop.f32.mrb[0].mxu0
        %v641 = vadd.f32 0.0, %v640
        %v642 = vpop.f32.mrb[0].mxu0
        %v643 = vpop.f32.mrb[0].mxu0
        %v644 = vadd.f32 0.0, %v643
        %v645 = vpop.f32.mrb[0].mxu0
        %646 = vmatprep.mubr.bf16.mxu0 0
        %647 = vmatmul.mubr.bf16.gmra.mrb[0].mxu0 %v464
        %v648 = vpop.f32.mrb[0].mxu0
        %v649 = vadd.f32 0.0, %v648
        %v650 = vpop.f32.mrb[0].mxu0
        %v651 = vpop.f32.mrb[0].mxu0
        %v652 = vadd.f32 0.0, %v651
        %v653 = vpop.f32.mrb[0].mxu0
        %654 = vmatprep.mubr.bf16.mxu0 0
        %655 = vmatmul.mubr.bf16.gmra.mrb[0].mxu0 %v465
        %v656 = vpop.f32.mrb[0].mxu0
        %v657 = vadd.f32 0.0, %v656
        %v658 = vpop.f32.mrb[0].mxu0
        %v659 = vpop.f32.mrb[0].mxu0
        %v660 = vadd.f32 0.0, %v659
        %v661 = vpop.f32.mrb[0].mxu0
        %662 = vmatprep.mubr.bf16.mxu0 0
        %663 = vmatmul.mubr.bf16.gmra.mrb[0].mxu0 %v466
        %v664 = vpop.f32.mrb[0].mxu0
        %v665 = vadd.f32 0.0, %v664
        %v666 = vpop.f32.mrb[0].mxu0
        %v667 = vpop.f32.mrb[0].mxu0
        %v668 = vadd.f32 0.0, %v667
        %v669 = vpop.f32.mrb[0].mxu0
        %670 = vmatprep.mubr.bf16.mxu0 0
        %671 = vmatmul.mubr.bf16.gmra.mrb[0].mxu0 %v467
        %v672 = vpop.f32.mrb[0].mxu0
        %v673 = vadd.f32 0.0, %v672
        %v674 = vpop.f32.mrb[0].mxu0
        %v675 = vpop.f32.mrb[0].mxu0
        %v676 = vadd.f32 0.0, %v675
        %v677 = vpop.f32.mrb[0].mxu0
        %678 = vmatprep.mubr.bf16.mxu0 0
        %679 = vmatmul.mubr.bf16.gmra.mrb[0].mxu0 %v468
        %v680 = vpop.f32.mrb[0].mxu0
        %v681 = vadd.f32 0.0, %v680
        %v682 = vpop.f32.mrb[0].mxu0
        %v683 = vpop.f32.mrb[0].mxu0
        %v684 = vadd.f32 0.0, %v683
        %v685 = vpop.f32.mrb[0].mxu0
        %686 = vmatprep.mubr.bf16.mxu0 0
        %687 = vmatmul.mubr.bf16.gmra.mrb[0].mxu0 %v469
        %v688 = vpop.f32.mrb[0].mxu0
        %v689 = vadd.f32 0.0, %v688
        %v690 = vpop.f32.mrb[0].mxu0
        %v691 = vpop.f32.mrb[0].mxu0
        %v692 = vadd.f32 0.0, %v691
        %v693 = vpop.f32.mrb[0].mxu0
        %694 = vdwg.mxu0
        %v695 = vadd.f32 %v310, %v569
        %v696 = vadd.f32 %v311, %v572
        %v697 = vadd.f32 %v312, %v577
        %v698 = vadd.f32 %v313, %v580
        %v699 = vadd.f32 %v314, %v585
        %v700 = vadd.f32 %v315, %v588
        %v701 = vadd.f32 %v316, %v593
        %v702 = vadd.f32 %v317, %v596
        %v703 = vadd.f32 %v318, %v601
        %v704 = vadd.f32 %v319, %v604
        %v705 = vadd.f32 %v320, %v609
        %v706 = vadd.f32 %v321, %v612
        %v707 = vadd.f32 %v322, %v617
        %v708 = vadd.f32 %v323, %v620
        %v709 = vadd.f32 %v324, %v625
        %v710 = vadd.f32 %v325, %v628
        %v711 = vadd.f32 %v326, %v633
        %v712 = vadd.f32 %v327, %v636
        %v713 = vadd.f32 %v328, %v641
        %v714 = vadd.f32 %v329, %v644
        %v715 = vadd.f32 %v330, %v649
        %v716 = vadd.f32 %v331, %v652
        %v717 = vadd.f32 %v332, %v657
        %v718 = vadd.f32 %v333, %v660
        %v719 = vadd.f32 %v334, %v665
        %v720 = vadd.f32 %v335, %v668
        %v721 = vadd.f32 %v336, %v673
        %v722 = vadd.f32 %v337, %v676
        %v723 = vadd.f32 %v338, %v681
        %v724 = vadd.f32 %v339, %v684
        %v725 = vadd.f32 %v340, %v689
        %v726 = vadd.f32 %v341, %v692
        %727 = vst [vmem:[#allocation2] sm:$0xff] %v695
        %728 = vst [vmem:[#allocation2 + $0x8] sm:$0xff] %v696
        %729 = vst [vmem:[#allocation2 + $0x10] sm:$0xff] %v697
        %730 = vst [vmem:[#allocation2 + $0x18] sm:$0xff] %v698
        %731 = vst [vmem:[#allocation2 + $0x20] sm:$0xff] %v699
        %732 = vst [vmem:[#allocation2 + $0x28] sm:$0xff] %v700
        %733 = vst [vmem:[#allocation2 + $0x30] sm:$0xff] %v701
        %734 = vst [vmem:[#allocation2 + $0x38] sm:$0xff] %v702
        %735 = vst [vmem:[#allocation2 + $0x40] sm:$0xff] %v703
        %736 = vst [vmem:[#allocation2 + $0x48] sm:$0xff] %v704
        %737 = vst [vmem:[#allocation2 + $0x50] sm:$0xff] %v705
        %738 = vst [vmem:[#allocation2 + $0x58] sm:$0xff] %v706
        %739 = vst [vmem:[#allocation2 + $0x60] sm:$0xff] %v707
        %740 = vst [vmem:[#allocation2 + $0x68] sm:$0xff] %v708
        %741 = vst [vmem:[#allocation2 + $0x70] sm:$0xff] %v709
        %742 = vst [vmem:[#allocation2 + $0x78] sm:$0xff] %v710
        %743 = vst [vmem:[#allocation2 + $0x80] sm:$0xff] %v711
        %744 = vst [vmem:[#allocation2 + $0x88] sm:$0xff] %v712
        %745 = vst [vmem:[#allocation2 + $0x90] sm:$0xff] %v713
        %746 = vst [vmem:[#allocation2 + $0x98] sm:$0xff] %v714
        %747 = vst [vmem:[#allocation2 + $0xa0] sm:$0xff] %v715
        %748 = vst [vmem:[#allocation2 + $0xa8] sm:$0xff] %v716
        %749 = vst [vmem:[#allocation2 + $0xb0] sm:$0xff] %v717
        %750 = vst [vmem:[#allocation2 + $0xb8] sm:$0xff] %v718
        %751 = vst [vmem:[#allocation2 + $0xc0] sm:$0xff] %v719
        %752 = vst [vmem:[#allocation2 + $0xc8] sm:$0xff] %v720
        %753 = vst [vmem:[#allocation2 + $0xd0] sm:$0xff] %v721
        %754 = vst [vmem:[#allocation2 + $0xd8] sm:$0xff] %v722
        %755 = vst [vmem:[#allocation2 + $0xe0] sm:$0xff] %v723
        %756 = vst [vmem:[#allocation2 + $0xe8] sm:$0xff] %v724
        %757 = vst [vmem:[#allocation2 + $0xf0] sm:$0xff] %v725
        %758 = vst [vmem:[#allocation2 + $0xf8] sm:$0xff] %v726
        // Predicated region
        $region41: #{tpu_custom_call.1} parent=27 // pred_check
          %p759 = pneg %p274
        $region42: #{tpu_custom_call.1} parent=27 // pred_check_branch
          %761 = sbr.rel (%p759) target = $region44
        $region43: #{tpu_custom_call.1} parent=27 // pred_region
          %v762 = vld [vmem:[#allocation2] sm:$0xff]
          %v763 = vld [vmem:[#allocation2 + $0x8] sm:$0xff]
          %v764 = vld [vmem:[#allocation2 + $0x10] sm:$0xff]
          %v765 = vld [vmem:[#allocation2 + $0x18] sm:$0xff]
          %v766 = vld [vmem:[#allocation2 + $0x20] sm:$0xff]
          %v767 = vld [vmem:[#allocation2 + $0x28] sm:$0xff]
          %v768 = vld [vmem:[#allocation2 + $0x30] sm:$0xff]
          %v769 = vld [vmem:[#allocation2 + $0x38] sm:$0xff]
          %v770 = vld [vmem:[#allocation2 + $0x40] sm:$0xff]
          %v771 = vld [vmem:[#allocation2 + $0x48] sm:$0xff]
          %v772 = vld [vmem:[#allocation2 + $0x50] sm:$0xff]
          %v773 = vld [vmem:[#allocation2 + $0x58] sm:$0xff]
          %v774 = vld [vmem:[#allocation2 + $0x60] sm:$0xff]
          %v775 = vld [vmem:[#allocation2 + $0x68] sm:$0xff]
          %v776 = vld [vmem:[#allocation2 + $0x70] sm:$0xff]
          %v777 = vld [vmem:[#allocation2 + $0x78] sm:$0xff]
          %v778 = vld [vmem:[#allocation2 + $0x80] sm:$0xff]
          %v779 = vld [vmem:[#allocation2 + $0x88] sm:$0xff]
          %v780 = vld [vmem:[#allocation2 + $0x90] sm:$0xff]
          %v781 = vld [vmem:[#allocation2 + $0x98] sm:$0xff]
          %v782 = vld [vmem:[#allocation2 + $0xa0] sm:$0xff]
          %v783 = vld [vmem:[#allocation2 + $0xa8] sm:$0xff]
          %v784 = vld [vmem:[#allocation2 + $0xb0] sm:$0xff]
          %v785 = vld [vmem:[#allocation2 + $0xb8] sm:$0xff]
          %v786 = vld [vmem:[#allocation2 + $0xc0] sm:$0xff]
          %v787 = vld [vmem:[#allocation2 + $0xc8] sm:$0xff]
          %v788 = vld [vmem:[#allocation2 + $0xd0] sm:$0xff]
          %v789 = vld [vmem:[#allocation2 + $0xd8] sm:$0xff]
          %v790 = vld [vmem:[#allocation2 + $0xe0] sm:$0xff]
          %v791 = vld [vmem:[#allocation2 + $0xe8] sm:$0xff]
          %v792 = vld [vmem:[#allocation2 + $0xf0] sm:$0xff]
          %v793 = vld [vmem:[#allocation2 + $0xf8] sm:$0xff]
          %v794 = vpack.c.bf16 %v763, %v762
          %v795 = vpack.c.bf16 %v765, %v764
          %v796 = vpack.c.bf16 %v767, %v766
          %v797 = vpack.c.bf16 %v769, %v768
          %v798 = vpack.c.bf16 %v771, %v770
          %v799 = vpack.c.bf16 %v773, %v772
          %v800 = vpack.c.bf16 %v775, %v774
          %v801 = vpack.c.bf16 %v777, %v776
          %v802 = vpack.c.bf16 %v779, %v778
          %v803 = vpack.c.bf16 %v781, %v780
          %v804 = vpack.c.bf16 %v783, %v782
          %v805 = vpack.c.bf16 %v785, %v784
          %v806 = vpack.c.bf16 %v787, %v786
          %v807 = vpack.c.bf16 %v789, %v788
          %v808 = vpack.c.bf16 %v791, %v790
          %v809 = vpack.c.bf16 %v793, %v792
          %v826 = vunpack.c.l.b16 %v794
          %v827 = vunpack.c.h.b16 %v794
          %v828 = vunpack.c.l.b16 %v795
          %v829 = vunpack.c.h.b16 %v795
          %v830 = vunpack.c.l.b16 %v796
          %v831 = vunpack.c.h.b16 %v796
          %v832 = vunpack.c.l.b16 %v797
          %v833 = vunpack.c.h.b16 %v797
          %v834 = vunpack.c.l.b16 %v798
          %v835 = vunpack.c.h.b16 %v798
          %v836 = vunpack.c.l.b16 %v799
          %v837 = vunpack.c.h.b16 %v799
          %v838 = vunpack.c.l.b16 %v800
          %v839 = vunpack.c.h.b16 %v800
          %v840 = vunpack.c.l.b16 %v801
          %v841 = vunpack.c.h.b16 %v801
          %v842 = vunpack.c.l.b16 %v802
          %v843 = vunpack.c.h.b16 %v802
          %v844 = vunpack.c.l.b16 %v803
          %v845 = vunpack.c.h.b16 %v803
          %v846 = vunpack.c.l.b16 %v804
          %v847 = vunpack.c.h.b16 %v804
          %v848 = vunpack.c.l.b16 %v805
          %v849 = vunpack.c.h.b16 %v805
          %v850 = vunpack.c.l.b16 %v806
          %v851 = vunpack.c.h.b16 %v806
          %v852 = vunpack.c.l.b16 %v807
          %v853 = vunpack.c.h.b16 %v807
          %v854 = vunpack.c.l.b16 %v808
          %v855 = vunpack.c.h.b16 %v808
          %v856 = vunpack.c.l.b16 %v809
          %v857 = vunpack.c.h.b16 %v809
          %v858 = vpack.c.b16 %v826, %v826
          %v859 = vpack.c.b16 %v827, %v827
          %v860 = vpack.c.b16 %v828, %v828
          %v861 = vpack.c.b16 %v829, %v829
          %v862 = vpack.c.b16 %v830, %v830
          %v863 = vpack.c.b16 %v831, %v831
          %v864 = vpack.c.b16 %v832, %v832
          %v865 = vpack.c.b16 %v833, %v833
          %v866 = vpack.c.b16 %v834, %v834
          %v867 = vpack.c.b16 %v835, %v835
          %v868 = vpack.c.b16 %v836, %v836
          %v869 = vpack.c.b16 %v837, %v837
          %v870 = vpack.c.b16 %v838, %v838
          %v871 = vpack.c.b16 %v839, %v839
          %v872 = vpack.c.b16 %v840, %v840
          %v873 = vpack.c.b16 %v841, %v841
          %v874 = vpack.c.b16 %v842, %v842
          %v875 = vpack.c.b16 %v843, %v843
          %v876 = vpack.c.b16 %v844, %v844
          %v877 = vpack.c.b16 %v845, %v845
          %v878 = vpack.c.b16 %v846, %v846
          %v879 = vpack.c.b16 %v847, %v847
          %v880 = vpack.c.b16 %v848, %v848
          %v881 = vpack.c.b16 %v849, %v849
          %v882 = vpack.c.b16 %v850, %v850
          %v883 = vpack.c.b16 %v851, %v851
          %v884 = vpack.c.b16 %v852, %v852
          %v885 = vpack.c.b16 %v853, %v853
          %v886 = vpack.c.b16 %v854, %v854
          %v887 = vpack.c.b16 %v855, %v855
          %v888 = vpack.c.b16 %v856, %v856
          %v889 = vpack.c.b16 %v857, %v857
          %922 = vst [vmem:[%s257] sm:$0xf] %v858
          %923 = vst [vmem:[%s257 + $0x4] sm:$0xf] %v859
          %924 = vst [vmem:[%s257 + $0x8] sm:$0xf] %v860
          %925 = vst [vmem:[%s257 + $0xc] sm:$0xf] %v861
          %926 = vst [vmem:[%s257 + $0x10] sm:$0xf] %v862
          %927 = vst [vmem:[%s257 + $0x14] sm:$0xf] %v863
          %928 = vst [vmem:[%s257 + $0x18] sm:$0xf] %v864
          %929 = vst [vmem:[%s257 + $0x1c] sm:$0xf] %v865
          %930 = vst [vmem:[%s257 + $0x20] sm:$0xf] %v866
          %931 = vst [vmem:[%s257 + $0x24] sm:$0xf] %v867
          %932 = vst [vmem:[%s257 + $0x28] sm:$0xf] %v868
          %933 = vst [vmem:[%s257 + $0x2c] sm:$0xf] %v869
          %934 = vst [vmem:[%s257 + $0x30] sm:$0xf] %v870
          %935 = vst [vmem:[%s257 + $0x34] sm:$0xf] %v871
          %936 = vst [vmem:[%s257 + $0x38] sm:$0xf] %v872
          %937 = vst [vmem:[%s257 + $0x3c] sm:$0xf] %v873
          %938 = vst [vmem:[%s257 + $0x40] sm:$0xf] %v874
          %939 = vst [vmem:[%s257 + $0x44] sm:$0xf] %v875
          %940 = vst [vmem:[%s257 + $0x48] sm:$0xf] %v876
          %941 = vst [vmem:[%s257 + $0x4c] sm:$0xf] %v877
          %942 = vst [vmem:[%s257 + $0x50] sm:$0xf] %v878
          %943 = vst [vmem:[%s257 + $0x54] sm:$0xf] %v879
          %944 = vst [vmem:[%s257 + $0x58] sm:$0xf] %v880
          %945 = vst [vmem:[%s257 + $0x5c] sm:$0xf] %v881
          %946 = vst [vmem:[%s257 + $0x60] sm:$0xf] %v882
          %947 = vst [vmem:[%s257 + $0x64] sm:$0xf] %v883
          %948 = vst [vmem:[%s257 + $0x68] sm:$0xf] %v884
          %949 = vst [vmem:[%s257 + $0x6c] sm:$0xf] %v885
          %950 = vst [vmem:[%s257 + $0x70] sm:$0xf] %v886
          %951 = vst [vmem:[%s257 + $0x74] sm:$0xf] %v887
          %952 = vst [vmem:[%s257 + $0x78] sm:$0xf] %v888
          %953 = vst [vmem:[%s257 + $0x7c] sm:$0xf] %v889
          %v954 = vadd.f32 %v762, %v763
          %v955 = vadd.f32 %v954, %v764
          %v956 = vadd.f32 %v955, %v765
          %v957 = vadd.f32 %v956, %v766
          %v958 = vadd.f32 %v957, %v767
          %v959 = vadd.f32 %v958, %v768
          %v960 = vadd.f32 %v959, %v769
          %v961 = vadd.f32 %v960, %v770
          %v962 = vadd.f32 %v961, %v771
          %v963 = vadd.f32 %v962, %v772
          %v964 = vadd.f32 %v963, %v773
          %v965 = vadd.f32 %v964, %v774
          %v966 = vadd.f32 %v965, %v775
          %v967 = vadd.f32 %v966, %v776
          %v968 = vadd.f32 %v967, %v777
          %v969 = vadd.f32 %v968, %v778
          %v970 = vadd.f32 %v969, %v779
          %v971 = vadd.f32 %v970, %v780
          %v972 = vadd.f32 %v971, %v781
          %v973 = vadd.f32 %v972, %v782
          %v974 = vadd.f32 %v973, %v783
          %v975 = vadd.f32 %v974, %v784
          %v976 = vadd.f32 %v975, %v785
          %v977 = vadd.f32 %v976, %v786
          %v978 = vadd.f32 %v977, %v787
          %v979 = vadd.f32 %v978, %v788
          %v980 = vadd.f32 %v979, %v789
          %v981 = vadd.f32 %v980, %v790
          %v982 = vadd.f32 %v981, %v791
          %v983 = vadd.f32 %v982, %v792
          %v984 = vadd.f32 %v983, %v793
          %v985 = vrot.slane %v984, 4
          %v986 = vadd.f32 %v984, %v985
          %v987 = vrot.slane %v986, 2
          %v988 = vadd.f32 %v986, %v987
          %v989 = vrot.slane %v988, 1
          %v990 = vadd.f32 %v988, %v989
          %v991 = vmul.f32 %v762, %v762
          %v992 = vmul.f32 %v763, %v763
          %v993 = vmul.f32 %v764, %v764
          %v994 = vmul.f32 %v765, %v765
          %v995 = vmul.f32 %v766, %v766
          %v996 = vmul.f32 %v767, %v767
          %v997 = vmul.f32 %v768, %v768
          %v998 = vmul.f32 %v769, %v769
          %v999 = vmul.f32 %v770, %v770
          %v1000 = vmul.f32 %v771, %v771
          %v1001 = vmul.f32 %v772, %v772
          %v1002 = vmul.f32 %v773, %v773
          %v1003 = vmul.f32 %v774, %v774
          %v1004 = vmul.f32 %v775, %v775
          %v1005 = vmul.f32 %v776, %v776
          %v1006 = vmul.f32 %v777, %v777
          %v1007 = vmul.f32 %v778, %v778
          %v1008 = vmul.f32 %v779, %v779
          %v1009 = vmul.f32 %v780, %v780
          %v1010 = vmul.f32 %v781, %v781
          %v1011 = vmul.f32 %v782, %v782
          %v1012 = vmul.f32 %v783, %v783
          %v1013 = vmul.f32 %v784, %v784
          %v1014 = vmul.f32 %v785, %v785
          %v1015 = vmul.f32 %v786, %v786
          %v1016 = vmul.f32 %v787, %v787
          %v1017 = vmul.f32 %v788, %v788
          %v1018 = vmul.f32 %v789, %v789
          %v1019 = vmul.f32 %v790, %v790
          %v1020 = vmul.f32 %v791, %v791
          %v1021 = vmul.f32 %v792, %v792
          %v1022 = vmul.f32 %v793, %v793
          %v1023 = vadd.f32 %v991, %v992
          %v1024 = vadd.f32 %v1023, %v993
          %v1025 = vadd.f32 %v1024, %v994
          %v1026 = vadd.f32 %v1025, %v995
          %v1027 = vadd.f32 %v1026, %v996
          %v1028 = vadd.f32 %v1027, %v997
          %v1029 = vadd.f32 %v1028, %v998
          %v1030 = vadd.f32 %v1029, %v999
          %v1031 = vadd.f32 %v1030, %v1000
          %v1032 = vadd.f32 %v1031, %v1001
          %v1033 = vadd.f32 %v1032, %v1002
          %v1034 = vadd.f32 %v1033, %v1003
          %v1035 = vadd.f32 %v1034, %v1004
          %v1036 = vadd.f32 %v1035, %v1005
          %v1037 = vadd.f32 %v1036, %v1006
          %v1038 = vadd.f32 %v1037, %v1007
          %v1039 = vadd.f32 %v1038, %v1008
          %v1040 = vadd.f32 %v1039, %v1009
          %v1041 = vadd.f32 %v1040, %v1010
          %v1042 = vadd.f32 %v1041, %v1011
          %v1043 = vadd.f32 %v1042, %v1012
          %v1044 = vadd.f32 %v1043, %v1013
          %v1045 = vadd.f32 %v1044, %v1014
          %v1046 = vadd.f32 %v1045, %v1015
          %v1047 = vadd.f32 %v1046, %v1016
          %v1048 = vadd.f32 %v1047, %v1017
          %v1049 = vadd.f32 %v1048, %v1018
          %v1050 = vadd.f32 %v1049, %v1019
          %v1051 = vadd.f32 %v1050, %v1020
          %v1052 = vadd.f32 %v1051, %v1021
          %v1053 = vadd.f32 %v1052, %v1022
          %v1054 = vrot.slane %v1053, 4
          %v1055 = vadd.f32 %v1053, %v1054
          %v1056 = vrot.slane %v1055, 2
          %v1057 = vadd.f32 %v1055, %v1056
          %v1058 = vrot.slane %v1057, 1
          %v1059 = vadd.f32 %v1057, %v1058
          %1060 = vst [vmem:[%s263] sm:$0x1] %v990
          %1061 = vst [vmem:[%s269] sm:$0x1] %v1059
        $region44: #{tpu_custom_call.1} parent=27 // pred_fallthru
          _
        %s1062 = sand.u32 %s100, 1
        %s1063 = scalar_lea.sflag [#allocation5], %s1062
        %s1064 = sand.u32 %s100, 1
        %s1065 = smul.addr %s1064, 128
        %s1066 = scalar_lea.vmem [#allocation8], %s1065
        %s1067 = sand.u32 %s26, 1
        %s1068 = scalar_lea.sflag [#allocation10], %s1067
        %s1069 = sand.u32 %s126, 1
        %s1070 = scalar_lea.vmem [#allocation9], %s1069
        %s1071 = sand.u32 %s26, 1
        %s1072 = scalar_lea.sflag [#allocation10], %s1071
        %s1073 = sand.u32 %s152, 1
        %s1074 = scalar_lea.vmem [#allocation11], %s1073
        // Predicated region
        $region45: #{tpu_custom_call.1} parent=27 // pred_check
          %p1075 = pneg %p110
        $region46: #{tpu_custom_call.1} parent=27 // pred_check_branch
          %1077 = sbr.rel (%p1075) target = $region48
        $region47: #{tpu_custom_call.1} parent=27 // pred_region
          %s1078 = smul.u32 32, %s30
          %s1080 = ssub.s32 2048, 2048
          %1081 = vsyncadd %s1063, %s1080
          %s1082 = smul.addr %s1078, 64
          %s1083 = scalar_lea.hbm %s2, %s1082
          %s1084 = sshll.u32 %s1066, 4
          %s1085 = int_to_ptr.vmem [resolvable:$true] %s1084
          %1090 = dma.vmem_to_hbm [thread:$0]  %s1085, 2048, %s1083, %s1063, 64, 64, 4
        $region48: #{tpu_custom_call.1} parent=27 // pred_fallthru
          _
        // Predicated region
        $region49: #{tpu_custom_call.1} parent=27 // pred_check
          %p1091 = pneg %p136
        $region50: #{tpu_custom_call.1} parent=27 // pred_check_branch
          %1093 = sbr.rel (%p1091) target = $region52
        $region51: #{tpu_custom_call.1} parent=27 // pred_region
          %s1095 = ssub.s32 16, 16
          %1096 = vsyncadd %s1068, %s1095
          %s1097 = smul.addr %s30, 16
          %s1098 = scalar_lea.hbm %s3, %s1097
          %s1100 = sshll.u32 %s1070, 4
          %s1101 = int_to_ptr.vmem [resolvable:$true] %s1100
          %1103 = dma.vmem_to_hbm [thread:$0]  %s1101, 16, %s1098, %s1068
        $region52: #{tpu_custom_call.1} parent=27 // pred_fallthru
          _
        // Predicated region
        $region53: #{tpu_custom_call.1} parent=27 // pred_check
          %p1104 = pneg %p162
        $region54: #{tpu_custom_call.1} parent=27 // pred_check_branch
          %1106 = sbr.rel (%p1104) target = $region56
        $region55: #{tpu_custom_call.1} parent=27 // pred_region
          %s1108 = ssub.s32 16, 16
          %1109 = vsyncadd %s1072, %s1108
          %s1110 = smul.addr %s30, 16
          %s1111 = scalar_lea.hbm %s4, %s1110
          %s1113 = sshll.u32 %s1074, 4
          %s1114 = int_to_ptr.vmem [resolvable:$true] %s1113
          %1116 = dma.vmem_to_hbm [thread:$0]  %s1114, 16, %s1111, %s1072
        $region56: #{tpu_custom_call.1} parent=27 // pred_fallthru
          _
      $region28: #{tpu_custom_call.1} parent=5 // pred_fallthru
        _
      %p1117 = scmp.le.s32.totalorder 2, %s21
      // Predicated region
      $region57: #{tpu_custom_call.1} parent=5 // pred_check
        %p1118 = pneg %p1117
      $region58: #{tpu_custom_call.1} parent=5 // pred_check_branch
        %1120 = sbr.rel (%p1118) target = $region60
      $region59: #{tpu_custom_call.1} parent=5 // pred_region
        %s1121 = ssub.s32 %s21, 2
        // Predicated region
        $region61: #{tpu_custom_call.1} parent=59 // pred_check
          %p1122 = pneg %p116
        $region62: #{tpu_custom_call.1} parent=59 // pred_check_branch
          %1124 = sbr.rel (%p1122) target = $region64
        $region63: #{tpu_custom_call.1} parent=59 // pred_region
          %s1125 = sand.u32 %s101, 1
          %s1126 = scalar_lea.sflag [#allocation5], %s1125
          %s1127 = sand.u32 %s101, 1
          %s1128 = smul.addr %s1127, 128
          %s1129 = scalar_lea.vmem [#allocation8], %s1128
          %1130 = dma.done %s1126, 2048
        $region64: #{tpu_custom_call.1} parent=59 // pred_fallthru
          _
        // Predicated region
        $region65: #{tpu_custom_call.1} parent=59 // pred_check
          %p1131 = pneg %p142
        $region66: #{tpu_custom_call.1} parent=59 // pred_check_branch
          %1133 = sbr.rel (%p1131) target = $region68
        $region67: #{tpu_custom_call.1} parent=59 // pred_region
          %s1134 = sand.u32 %s27, 1
          %s1135 = scalar_lea.sflag [#allocation10], %s1134
          %s1136 = sand.u32 %s127, 1
          %s1137 = scalar_lea.vmem [#allocation9], %s1136
          %1138 = dma.done %s1135, 16
        $region68: #{tpu_custom_call.1} parent=59 // pred_fallthru
          _
        // Predicated region
        $region69: #{tpu_custom_call.1} parent=59 // pred_check
          %p1139 = pneg %p168
        $region70: #{tpu_custom_call.1} parent=59 // pred_check_branch
          %1141 = sbr.rel (%p1139) target = $region72
        $region71: #{tpu_custom_call.1} parent=59 // pred_region
          %s1142 = sand.u32 %s27, 1
          %s1143 = scalar_lea.sflag [#allocation10], %s1142
          %s1144 = sand.u32 %s153, 1
          %s1145 = scalar_lea.vmem [#allocation11], %s1144
          %1146 = dma.done %s1143, 16
        $region72: #{tpu_custom_call.1} parent=59 // pred_fallthru
          _
      $region60: #{tpu_custom_call.1} parent=5 // pred_fallthru
        _
    $region6: #{tpu_custom_call.1} parent=1 // loop_footer
      %s25 = sadd.s32 1, %s21
    $region7: #{tpu_custom_call.1} parent=1 // loop_footer_branch
      %20 = sbr.rel target = $region3
    $region8: #{tpu_custom_call.1} parent=1 // loop_exit
      _
    %1147 = vsyncpa [#allocation4], 1
    %s1148 = scalar_lea.sflag [#allocation4], 1
    %1149 = vsyncpa %s1148, 1
    %1150 = vsyncpa [#allocation7], 1
    %1151 = vsyncpa [#allocation5], 1
    %s1152 = scalar_lea.sflag [#allocation5], 1
    %1153 = vsyncpa %s1152, 1
    %1154 = vsyncpa [#allocation10], 1
    %s1155 = scalar_lea.sflag [#allocation10], 1
    %1156 = vsyncpa %s1155, 1

</llo_original>
